<compile_context>
chip_gen: v7x
topology: tpu7x:2x2x1
jax: 0.10.0
libtpu: 0.0.40
codegen_flags: <defaults>
</compile_context>

<pallas_src>
import functools
import math

import jax
import jax.numpy as jnp
from jax.experimental import pallas as pl
from jax.experimental.pallas import tpu as pltpu

LANE = 128   # channel dims are zero-padded to this lane width at init


# ---------------------------------------------------------------------------
# Pallas kernels
# ---------------------------------------------------------------------------

def _mlp_kernel(debug, x_ref, ncol_ref, w_mlp_ref, b_mlp_ref, bn1_s_ref, bn1_b_ref,
                w_gcn_ref, hws_ref, *dbg_refs):
    """Per-node MLP block + GCN linear for one row tile of nodes.

    hws = dinv * (BN(relu((x * scale) @ W_mlp + b)) @ W_gcn), stored bf16.
    dinv is 0 for removed / padded nodes, so their hws rows are exactly zero and they
    send no messages in the propagate kernel (equivalent to PyG's edge filtering).
    """
    ncol = ncol_ref[...]                       # (TM, 4): [scale, mask, dinv, 0]
    scale = ncol[:, 0:1]
    dinv = ncol[:, 2:3]
    x = x_ref[...] * scale
    h = jnp.dot(x, w_mlp_ref[...], preferred_element_type=jnp.float32) + b_mlp_ref[...]
    h = jnp.maximum(h, 0.0)
    h = h * bn1_s_ref[...] + bn1_b_ref[...]    # BN (eval mode, folded)
    hw = jnp.dot(h, w_gcn_ref[...], preferred_element_type=jnp.float32)
    hws_ref[...] = (hw * dinv).astype(jnp.bfloat16)
    if debug:
        dbg_refs[0][...] = h * ncol[:, 1:2]    # masked mlp embedding (diagnostic only)


def _propagate_kernel(debug, a_ref, hws_ref, ncol_ref, b_gcn_ref, bn2_s_ref,
                      bn2_b_ref, w_rel_t_ref, w_root_t_ref,
                      out_ref, root_ref, agg_ref, *dbg_refs):
    """GCN propagate + BN + ReLU with the SAGPooling GraphConv reductions fused in.

    Single pass over the (TM, N) bf16 adjacency row tile per grid step:
      neigh = A_tile @ hws                                  (bf16 x bf16 MXU)
      out   = relu(BN(dinv * (neigh + hws_tile) + b_gcn)) * mask
      g1    = out @ w_rel ; root = out @ w_root             (VPU mul + lane reduce)
      A @ g1 accumulated across row tiles via symmetry of A:
          A @ g1 == sum_tiles (g1_tile^T @ A_tile)^T
    The (1, N) accumulator lives in the resident output block (node axis "arbitrary").
    """
    t = pl.program_id(0)
    tm = a_ref.shape[0]

    @pl.when(t == 0)
    def _init():
        agg_ref[...] = jnp.zeros_like(agg_ref)

    a = a_ref[...]                                                        # (TM, N) bf16
    neigh = jnp.dot(a, hws_ref[...], preferred_element_type=jnp.float32)  # (TM, C) f32

    ncol = ncol_ref[...]
    m = ncol[:, 1:2]
    dinv = ncol[:, 2:3]

    # self-loop term: this tile's rows of hws, sliced from the resident const block
    row0 = pl.multiple_of(t * tm, tm)
    self_hws = hws_ref[pl.ds(row0, tm), :].astype(jnp.float32)

    # D^-1/2 (A+I) D^-1/2 (hW) + b  ==  dinv * (A @ (dinv*hW) + dinv*hW) + b
    g = dinv * (neigh + self_hws) + b_gcn_ref[...]
    gn = g * bn2_s_ref[...] + bn2_b_ref[...]               # BN (eval mode, folded)
    out = jnp.maximum(gn, 0.0) * m                         # ReLU, masked in-kernel
    out_ref[...] = out

    # SAG GraphConv C->1 projections as VPU multiply + lane reduce (no 1-wide MXU out)
    g1 = jnp.sum(out * w_rel_t_ref[...], axis=-1, keepdims=True)          # (TM, 1)
    root_ref[...] = jnp.sum(out * w_root_t_ref[...], axis=-1, keepdims=True)

    # fused SAG score matvec: accumulate g1_tile^T @ A_tile into the (1, N) block
    g1_row = jnp.transpose(g1).astype(jnp.bfloat16)                       # (1, TM)
    agg_ref[...] += jnp.dot(g1_row, a, preferred_element_type=jnp.float32)

    if debug:
        dbg_refs[0][...] = g * m                           # conv embedding
        dbg_refs[1][...] = gn * m                          # norm embedding


def _head_kernel(pool_mat_ref, x_ref, w1_ref, b1_ref, w2_ref, b2_ref,
                 pooled_ref, fc1_ref, logits_ref):
    # global_mean_pool (pool_mat already encodes mask, score scaling and 1/count)
    pooled = jnp.dot(pool_mat_ref[...], x_ref[...], preferred_element_type=jnp.float32)
    pooled_ref[...] = pooled
    h = jnp.dot(pooled, w1_ref[...], preferred_element_type=jnp.float32) + b1_ref[...]
    fc1_ref[...] = h
    h = jnp.maximum(h, 0.0)
    logits_ref[...] = (jnp.dot(h, w2_ref[...], preferred_element_type=jnp.float32)
                       + b2_ref[...])


# ---------------------------------------------------------------------------
# pallas_call wrappers (row-tiled over nodes)
# ---------------------------------------------------------------------------

def _row_spec(tm, c):
    return pl.BlockSpec((tm, c), lambda i: (i, 0))


def _const_spec(shape):
    nd = len(shape)
    return pl.BlockSpec(shape, lambda i, _nd=nd: (0,) * _nd)


def _round_up(x, m):
    return ((x + m - 1) // m) * m


def _derive_tiling(np_, cp, tile_cap=None):
    """Chip-derived row-tile size and VMEM limit.

    Budget the double-buffered (TM, N) bf16 adjacency tile plus the (TM, C) f32 node
    tiles against ~45% of physical VMEM; vmem_limit is set to ~60% (uses v5e/v6e's
    128 MiB, leaves compiler headroom on v7x's 64 MiB).  TM is a multiple of 16 (bf16
    sublane packing) that divides the padded node count.
    """
    try:
        vmem_cap = int(getattr(pltpu.get_tpu_info(), "vmem_capacity_bytes", 0))
    except Exception:
        vmem_cap = 0
    if vmem_cap <= 0:
        vmem_cap = 64 * 1024 * 1024            # conservative (v7x) fallback
    vmem_limit = int(vmem_cap * 0.60)
    tile_budget = int(vmem_cap * 0.45)
    # resident constants: hws (N, C) bf16 (double buffered), weights, (1, N) accumulator
    const_bytes = 2 * np_ * cp * 2 + 8 * cp * 4 + 2 * np_ * 4 + (64 << 10)
    # per node-row (double buffered): A bf16 + x/out f32 + hws bf16 + nodecol
    per_row = 2 * np_ * 2 + 4 * cp * 4 + 2 * cp * 2 + 64
    tm_max = max(16, (tile_budget - const_bytes) // per_row)
    if tile_cap is not None:
        tm_max = min(tm_max, tile_cap)
    for cand in (4096, 2048, 1024, 512, 256, 128, 64, 32, 16):
        if cand <= tm_max and np_ % cand == 0:
            return cand, vmem_limit
    return 16, vmem_limit


def mlp_forward(x, nodecol, lp, tm, vmem_limit, debug):
    np_, cp = x.shape
    nt = np_ // tm
    out_shape = [jax.ShapeDtypeStruct((np_, cp), jnp.bfloat16)]        # hws (bf16)
    out_specs = [_row_spec(tm, cp)]
    if debug:
        out_shape.append(jax.ShapeDtypeStruct((np_, cp), jnp.float32))  # mlp embedding
        out_specs.append(_row_spec(tm, cp))
    return pl.pallas_call(
        functools.partial(_mlp_kernel, debug),
        grid=(nt,),
        in_specs=[_row_spec(tm, cp), _row_spec(tm, 4),
                  _const_spec(lp['w_mlp'].shape), _const_spec(lp['b_mlp'].shape),
                  _const_spec(lp['bn1_s'].shape), _const_spec(lp['bn1_b'].shape),
                  _const_spec(lp['w_gcn'].shape)],
        out_specs=tuple(out_specs),
        out_shape=tuple(out_shape),
        compiler_params=pltpu.CompilerParams(
            dimension_semantics=("parallel",), vmem_limit_bytes=vmem_limit),
    )(x, nodecol, lp['w_mlp'], lp['b_mlp'], lp['bn1_s'], lp['bn1_b'], lp['w_gcn'])


def propagate_forward(a_bf, hws, nodecol, lp, tm, vmem_limit, debug):
    np_ = a_bf.shape[0]
    cp = hws.shape[1]
    nt = np_ // tm
    out_shape = [jax.ShapeDtypeStruct((np_, cp), jnp.float32),   # out (masked relu)
                 jax.ShapeDtypeStruct((np_, 1), jnp.float32),    # out @ w_root
                 jax.ShapeDtypeStruct((1, np_), jnp.float32)]    # A @ (out @ w_rel)
    out_specs = [_row_spec(tm, cp), _row_spec(tm, 1),
                 pl.BlockSpec((1, np_), lambda i: (0, 0))]
    if debug:
        out_shape += [jax.ShapeDtypeStruct((np_, cp), jnp.float32)] * 2  # conv, norm emb
        out_specs += [_row_spec(tm, cp)] * 2
    return pl.pallas_call(
        functools.partial(_propagate_kernel, debug),
        grid=(nt,),
        in_specs=[pl.BlockSpec((tm, np_), lambda i: (i, 0)),   # adjacency row tile (bf16)
                  _const_spec((np_, cp)),                      # hws, all nodes (resident)
                  _row_spec(tm, 4),
                  _const_spec(lp['b_gcn'].shape), _const_spec(lp['bn2_s'].shape),
                  _const_spec(lp['bn2_b'].shape),
                  _const_spec(lp['w_rel_t'].shape), _const_spec(lp['w_root_t'].shape)],
        out_specs=tuple(out_specs),
        out_shape=tuple(out_shape),
        compiler_params=pltpu.CompilerParams(
            dimension_semantics=("arbitrary",),   # (1, N) score accumulator across tiles
            vmem_limit_bytes=vmem_limit),
    )(a_bf, hws, nodecol, lp['b_gcn'], lp['bn2_s'], lp['bn2_b'],
      lp['w_rel_t'], lp['w_root_t'])


def head_forward(pool_mat, x, w1, b1, w2, b2, vmem_limit):
    b = pool_mat.shape[0]
    cp = x.shape[1]
    fc_n = w1.shape[1]
    ncls = w2.shape[1]
    args = (pool_mat, x, w1, b1, w2, b2)
    out_shape = (jax.ShapeDtypeStruct((b, cp), jnp.float32),     # gb_pool
                 jax.ShapeDtypeStruct((b, fc_n), jnp.float32),   # fc1
                 jax.ShapeDtypeStruct((b, ncls), jnp.float32))   # fc2 / logits
    return pl.pallas_call(
        _head_kernel,
        grid=(1,),
        in_specs=[_const_spec(a.shape) for a in args],
        out_specs=tuple(_const_spec(s.shape) for s in out_shape),
        out_shape=out_shape,
        compiler_params=pltpu.CompilerParams(
            dimension_semantics=("arbitrary",), vmem_limit_bytes=vmem_limit),
    )(*args)


# ---------------------------------------------------------------------------
# Plain-JAX glue: degree vector, sort-based SAG top-k masking (no N x N temporaries)
# ---------------------------------------------------------------------------

def sag_topk_mask(score, batch, mask, num_graphs, ratio=0.8):
    """Keep top ceil(ratio * n_kept_g) scoring (currently kept) nodes per graph.

    O(N log N) sort-based ranking; removed nodes get -inf and sort to the back of
    their graph segment, so the in-graph rank counts only better-scoring kept nodes.
    Selection uses the RAW GraphConv score (PyG SAGPooling semantics).
    """
    n = score.shape[0]
    neg = jnp.where(mask, score, -jnp.inf)
    idx = jnp.arange(n, dtype=jnp.int32)
    # primary: batch asc; secondary: score desc; tertiary: index asc (tie-break)
    order = jnp.lexsort((idx, -neg, batch))
    counts_all = jnp.bincount(batch, length=num_graphs).astype(jnp.int32)
    starts = jnp.concatenate(
        [jnp.zeros((1,), jnp.int32), jnp.cumsum(counts_all)[:-1].astype(jnp.int32)])
    rank_sorted = (idx - starts[batch[order]]).astype(jnp.int32)
    rank = jnp.zeros((n,), jnp.int32).at[order].set(rank_sorted)
    n_kept = jnp.bincount(batch, weights=mask.astype(jnp.float32), length=num_graphs)
    k_per = jnp.ceil(ratio * n_kept).astype(jnp.int32)
    return mask & (rank < k_per[batch])


def mesh_cls_forward(x0, edge_index, batch, params, num_graphs,
                     node_tile=None, return_embeddings=False):
    n, f0 = x0.shape
    cp = params['layers'][0]['w_mlp'].shape[1]          # padded channel width (static)
    np_ = _round_up(max(n, LANE), LANE)                 # node count padded to 128 lanes

    # Pad node dim; padded nodes carry mask=0 / dinv=0 and are assigned to the last
    # graph (the mask excludes them from top-k and pooling).
    x = jnp.zeros((np_, cp), jnp.float32).at[:n, :f0].set(x0)
    batch = batch.astype(jnp.int32)
    if np_ > n:
        batch = jnp.concatenate(
            [batch, jnp.full((np_ - n,), num_graphs - 1, jnp.int32)])

    # Dense adjacency built ONCE, directly in bf16 (0/1 entries exact; half the HBM/VMEM
    # bytes of f32).  NOTE: the fused in-kernel score reduction requires A == A^T, i.e.
    # edge_index must contain both directions of every edge (true for mesh graphs).
    a0_bf = (jnp.zeros((np_, np_), jnp.bfloat16)
             .at[edge_index[1], edge_index[0]].set(jnp.ones((), jnp.bfloat16)))

    tm, vmem_limit = _derive_tiling(np_, cp, node_tile)

    mask = jnp.arange(np_) < n                     # which nodes still exist
    scale = jnp.ones((np_,), jnp.float32)          # SAG score scaling from previous pool
    embeddings = {}

    for i, lp in enumerate(params['layers']):
        mf = mask.astype(jnp.float32)
        # GCN degree (self loop, kept nodes only), on the same bf16 adjacency.
        # TODO(synk): incremental degree update / quantized A to shrink this N^2 pass.
        deg = mf * (jnp.dot(a0_bf, mf.astype(jnp.bfloat16),
                            preferred_element_type=jnp.float32) + 1.0)
        dinv = jnp.where(deg > 0, 1.0 / jnp.sqrt(jnp.maximum(deg, 1.0)), 0.0)
        nodecol = jnp.stack([scale, mf, dinv, jnp.zeros_like(mf)], axis=-1)  # (NP, 4)

        mlp_outs = mlp_forward(x, nodecol, lp, tm, vmem_limit, return_embeddings)
        hws = mlp_outs[0]
        prop_outs = propagate_forward(a0_bf, hws, nodecol, lp, tm, vmem_limit,
                                      return_embeddings)
        out, root, agg_row = prop_outs[0], prop_outs[1], prop_outs[2]

        # SAGPooling(ratio=0.8): select on the raw GraphConv score, scale by tanh(score).
        raw = agg_row[0][:, None] + lp['b_rel'] + root          # (NP, 1) raw score
        new_mask = sag_topk_mask(raw[:, 0], batch, mask, num_graphs, ratio=0.8)
        new_scale = jnp.where(new_mask, jnp.tanh(raw[:, 0]), 0.0)

        if return_embeddings:
            # Diagnostic embeddings (removed nodes are zero rows; padded channel columns
            # beyond the real width are exactly zero).
            embeddings['mlp{}'.format(i)] = mlp_outs[1][:n]
            embeddings['conv{}'.format(i)] = prop_outs[3][:n]
            embeddings['norm{}'.format(i)] = prop_outs[4][:n]
            embeddings['conv_relu{}'.format(i)] = out[:n]
            embeddings['pool{}'.format(i)] = (out * new_scale[:, None])[:n]

        mask = new_mask
        scale = new_scale
        x = out

    # global_mean_pool over kept nodes (score scaling and 1/count folded into pool_mat).
    onehot = (batch[None, :] == jnp.arange(num_graphs)[:, None]).astype(jnp.float32)
    mf = mask.astype(jnp.float32)
    cnt = jnp.maximum(onehot @ mf, 1.0)
    pool_mat = onehot * (mf * scale)[None, :] / cnt[:, None]

    pooled, fc1_out, logits = head_forward(
        pool_mat, x, params['fc1_w'], params['fc1_b'],
        params['fc2_w'], params['fc2_b'], vmem_limit)
    embeddings['gb_pool'] = pooled
    embeddings['fc1'] = fc1_out
    embeddings['fc2'] = logits
    return logits, embeddings


# ---------------------------------------------------------------------------
# Deterministic parameter init (torch-Linear-style fan-in uniform; BN at torch defaults)
# ---------------------------------------------------------------------------

def _linear(key, fan_in, fan_out, bias=True):
    k1, k2 = jax.random.split(key)
    bound = 1.0 / math.sqrt(fan_in)
    w = jax.random.uniform(k1, (fan_in, fan_out), jnp.float32, -bound, bound)
    b = (jax.random.uniform(k2, (1, fan_out), jnp.float32, -bound, bound)
         if bias else None)
    return w, b


def _pad_to(a, shape):
    out = jnp.zeros(shape, a.dtype)
    return out.at[tuple(slice(0, s) for s in a.shape)].set(a)


def init_params(key, k_list, fc_n, nclasses, eps=1e-5):
    """All channel dims zero-padded to LANE (=128) so every kernel block is lane-dense
    (unmasked vector loads/stores); the zero pad rows/cols are exact no-ops."""
    cp = LANE
    assert max(k_list) <= cp, "channel widths must be <= LANE for zero-padding"
    bn_s_val = 1.0 / math.sqrt(1.0 + eps)      # gamma=1, beta=0, mean=0, var=1 (eval)
    params = {'layers': []}
    for i in range(len(k_list) - 1):
        cin, cout = k_list[i], k_list[i + 1]
        key, k1, k2, k3, k4 = jax.random.split(key, 5)
        w_mlp, b_mlp = _linear(k1, cin, cout)
        w_gcn, _ = _linear(k2, cout, cout, bias=False)   # GCNConv internal lin (no bias)
        w_rel, b_rel = _linear(k3, cout, 1)              # SAG GraphConv lin_rel
        w_root, _ = _linear(k4, cout, 1, bias=False)     # SAG GraphConv lin_root
        params['layers'].append(dict(
            w_mlp=_pad_to(w_mlp, (cp, cp)), b_mlp=_pad_to(b_mlp, (1, cp)),
            bn1_s=jnp.full((1, cp), bn_s_val, jnp.float32),
            bn1_b=jnp.zeros((1, cp), jnp.float32),
            w_gcn=_pad_to(w_gcn, (cp, cp)),
            b_gcn=jnp.zeros((1, cp), jnp.float32),       # GCNConv bias (zeros at init)
            bn2_s=jnp.full((1, cp), bn_s_val, jnp.float32),
            bn2_b=jnp.zeros((1, cp), jnp.float32),
            w_rel_t=_pad_to(w_rel.T, (1, cp)), b_rel=b_rel,
            w_root_t=_pad_to(w_root.T, (1, cp))))
    key, kf1, kf2 = jax.random.split(key, 3)
    fc1_w, fc1_b = _linear(kf1, k_list[-1], fc_n)
    fc2_w, fc2_b = _linear(kf2, fc_n, nclasses)
    params['fc1_w'] = _pad_to(fc1_w, (cp, fc_n))
    params['fc1_b'] = fc1_b
    params['fc2_w'] = fc2_w
    params['fc2_b'] = fc2_b
    return params


# ---------------------------------------------------------------------------
# Example run
# ---------------------------------------------------------------------------

if __name__ == "__main__":
    nf0 = 16
    conv_res = [32, 32]        # 2 mesh conv blocks
    nclasses = 10
    fc_n = 32
    nodes_per_graph = 32
    num_graphs = 2
    N = num_graphs * nodes_per_graph          # 64 nodes -> padded to 128 in the wrapper

    key = jax.random.PRNGKey(0)
    kx, kp = jax.random.split(key)
    x0 = jax.random.normal(kx, (N, nf0), jnp.float32)

    # symmetric ring + chord edges within each graph (both directions inserted -> A == A^T,
    # required by the fused in-kernel score reduction)
    src_list, dst_list = [], []
    for g in range(num_graphs):
        off = g * nodes_per_graph
        for i in range(nodes_per_graph):
            j = (i + 1) % nodes_per_graph
            c = (i + 5) % nodes_per_graph
            src_list += [off + i, off + j, off + i, off + c]
            dst_list += [off + j, off + i, off + c, off + i]
    edge_index = jnp.array([src_list, dst_list], dtype=jnp.int32)
    batch = jnp.repeat(jnp.arange(num_graphs, dtype=jnp.int32), nodes_per_graph)

    params = init_params(kp, [nf0] + conv_res, fc_n, nclasses)

    fwd = jax.jit(mesh_cls_forward, static_argnums=(4, 5, 6))

    # node_tile=64 -> 2 row tiles per layer kernel at this toy size (exercises the
    # cross-tile score accumulation); production leaves node_tile=None (chip-derived).
    logits, _ = fwd(x0, edge_index, batch, params, num_graphs, 64, False)
    jax.block_until_ready(logits)
    assert logits.shape == (num_graphs, nclasses)
    assert bool(jnp.all(jnp.isfinite(logits)))

    # debug path (full embedding dict, matching the torch module's outputs)
    logits_dbg, emb = fwd(x0, edge_index, batch, params, num_graphs, 64, True)
    jax.block_until_ready(logits_dbg)
    assert emb['fc2'].shape == (num_graphs, nclasses)
    assert emb['conv_relu0'].shape[0] == N
    assert bool(jnp.allclose(logits, logits_dbg, atol=1e-4, rtol=1e-4))

    print("KERNEL_OK")
</pallas_src>

<mosaic_0001>
module attributes {stable_mosaic.version = 11 : i64} {
  func.func private @main(%arg0: i32) attributes {dimension_semantics = [#tpu.dimension_semantics<core_parallel>], iteration_bounds = array<i64: 2>, tpu.core_type = #tpu.core_type<sc_scalar_subcore>, window_params = []} {
    return
  }
}

module attributes {stable_mosaic.version = 11 : i64} {
  func.func private @main(%arg0: i32) attributes {dimension_semantics = [#tpu.dimension_semantics<core_parallel>], iteration_bounds = array<i64: 2>, tpu.core_type = #tpu.core_type<sc_scalar_subcore>, window_params = []} {
    return
  }
}

module attributes {stable_mosaic.version = 11 : i64} {
  func.func @_mlp_kernel(%arg0: i32, %arg1: memref<64x128xf32, #tpu.memory_space<vmem>>, %arg2: memref<64x4xf32, #tpu.memory_space<vmem>>, %arg3: memref<128x128xf32, #tpu.memory_space<vmem>>, %arg4: memref<1x128xf32, #tpu.memory_space<vmem>>, %arg5: memref<1x128xf32, #tpu.memory_space<vmem>>, %arg6: memref<1x128xf32, #tpu.memory_space<vmem>>, %arg7: memref<128x128xf32, #tpu.memory_space<vmem>>, %arg8: memref<64x128xbf16, #tpu.memory_space<vmem>>) attributes {dimension_semantics = [#tpu.dimension_semantics<parallel>], iteration_bounds = array<i64: 2>, scalar_prefetch = 0 : i64, scratch_operands = 0 : i64, tpu.core_type = #tpu.core_type<tc>, window_params = [{transform_indices = @transform_0, window_bounds = array<i64: 64, 128>}, {transform_indices = @transform_1, window_bounds = array<i64: 64, 4>}, {pipeline_mode = #tpu.pipeline_mode<synchronous>, transform_indices = @transform_2, window_bounds = array<i64: 128, 128>}, {pipeline_mode = #tpu.pipeline_mode<synchronous>, transform_indices = @transform_3, window_bounds = array<i64: 1, 128>}, {pipeline_mode = #tpu.pipeline_mode<synchronous>, transform_indices = @transform_4, window_bounds = array<i64: 1, 128>}, {pipeline_mode = #tpu.pipeline_mode<synchronous>, transform_indices = @transform_5, window_bounds = array<i64: 1, 128>}, {pipeline_mode = #tpu.pipeline_mode<synchronous>, transform_indices = @transform_6, window_bounds = array<i64: 128, 128>}, {transform_indices = @transform_7, window_bounds = array<i64: 64, 128>}]} {
    %c0 = arith.constant 0 : index
    %c0_0 = arith.constant 0 : index
    %0 = vector.load %arg2[%c0, %c0_0] : memref<64x4xf32, #tpu.memory_space<vmem>>, vector<64x4xf32>
    %1 = vector.extract_strided_slice %0 {offsets = [0, 0], sizes = [64, 1], strides = [1, 1]} : vector<64x4xf32> to vector<64x1xf32>
    %2 = vector.extract_strided_slice %0 {offsets = [0, 2], sizes = [64, 1], strides = [1, 1]} : vector<64x4xf32> to vector<64x1xf32>
    %c0_1 = arith.constant 0 : index
    %c0_2 = arith.constant 0 : index
    %3 = vector.load %arg1[%c0_1, %c0_2] : memref<64x128xf32, #tpu.memory_space<vmem>>, vector<64x128xf32>
    %4 = vector.broadcast %1 : vector<64x1xf32> to vector<64x128xf32>
    %5 = arith.mulf %3, %4 : vector<64x128xf32>
    %c0_3 = arith.constant 0 : index
    %c0_4 = arith.constant 0 : index
    %6 = vector.load %arg3[%c0_3, %c0_4] : memref<128x128xf32, #tpu.memory_space<vmem>>, vector<128x128xf32>
    %cst = arith.constant dense<0.000000e+00> : vector<64x128xf32>
    %7 = tpu.matmul %5, %6, %cst {dimension_numbers = #tpu.dot_dimension_numbers<[1], [0], [0], [1], [0, 0, 1, 1], [], []>} : vector<64x128xf32>, vector<128x128xf32>, vector<64x128xf32> -> vector<64x128xf32>
    %c0_5 = arith.constant 0 : index
    %c0_6 = arith.constant 0 : index
    %8 = vector.load %arg4[%c0_5, %c0_6] : memref<1x128xf32, #tpu.memory_space<vmem>>, vector<1x128xf32>
    %9 = vector.broadcast %8 : vector<1x128xf32> to vector<64x128xf32>
    %10 = arith.addf %7, %9 : vector<64x128xf32>
    %cst_7 = arith.constant 0.000000e+00 : f32
    %11 = vector.broadcast %cst_7 : f32 to vector<64x128xf32>
    %12 = arith.maximumf %10, %11 : vector<64x128xf32>
    %c0_8 = arith.constant 0 : index
    %c0_9 = arith.constant 0 : index
    %13 = vector.load %arg5[%c0_8, %c0_9] : memref<1x128xf32, #tpu.memory_space<vmem>>, vector<1x128xf32>
    %14 = vector.broadcast %13 : vector<1x128xf32> to vector<64x128xf32>
    %15 = arith.mulf %12, %14 : vector<64x128xf32>
    %c0_10 = arith.constant 0 : index
    %c0_11 = arith.constant 0 : index
    %16 = vector.load %arg6[%c0_10, %c0_11] : memref<1x128xf32, #tpu.memory_space<vmem>>, vector<1x128xf32>
    %17 = vector.broadcast %16 : vector<1x128xf32> to vector<64x128xf32>
    %18 = arith.addf %15, %17 : vector<64x128xf32>
    %c0_12 = arith.constant 0 : index
    %c0_13 = arith.constant 0 : index
    %19 = vector.load %arg7[%c0_12, %c0_13] : memref<128x128xf32, #tpu.memory_space<vmem>>, vector<128x128xf32>
    %cst_14 = arith.constant dense<0.000000e+00> : vector<64x128xf32>
    %20 = tpu.matmul %18, %19, %cst_14 {dimension_numbers = #tpu.dot_dimension_numbers<[1], [0], [0], [1], [0, 0, 1, 1], [], []>} : vector<64x128xf32>, vector<128x128xf32>, vector<64x128xf32> -> vector<64x128xf32>
    %21 = vector.broadcast %2 : vector<64x1xf32> to vector<64x128xf32>
    %22 = arith.mulf %20, %21 : vector<64x128xf32>
    %23 = arith.truncf %22 : vector<64x128xf32> to vector<64x128xbf16>
    %c0_15 = arith.constant 0 : index
    %c0_16 = arith.constant 0 : index
    %24 = vector.load %arg8[%c0_15, %c0_16] : memref<64x128xbf16, #tpu.memory_space<vmem>>, vector<64x128xbf16>
    tpu.vector_store %arg8[%c0_15, %c0_16], %23 {strides = array<i32>} : memref<64x128xbf16, #tpu.memory_space<vmem>>, vector<64x128xbf16>,
    return
  }
  func.func @transform_0(%arg0: i32) -> (i32, i32) {
    %c0_i32 = arith.constant 0 : i32
    %c0_i32_0 = arith.constant 0 : i32
    return %arg0, %c0_i32 : i32, i32
  }
  func.func @transform_1(%arg0: i32) -> (i32, i32) {
    %c0_i32 = arith.constant 0 : i32
    %c0_i32_0 = arith.constant 0 : i32
    return %arg0, %c0_i32 : i32, i32
  }
  func.func @transform_2(%arg0: i32) -> (i32, i32) {
    %c0_i32 = arith.constant 0 : i32
    %c0_i32_0 = arith.constant 0 : i32
    %c0_i32_1 = arith.constant 0 : i32
    return %c0_i32, %c0_i32_0 : i32, i32
  }
  func.func @transform_3(%arg0: i32) -> (i32, i32) {
    %c0_i32 = arith.constant 0 : i32
    %c0_i32_0 = arith.constant 0 : i32
    %c0_i32_1 = arith.constant 0 : i32
    return %c0_i32, %c0_i32_0 : i32, i32
  }
  func.func @transform_4(%arg0: i32) -> (i32, i32) {
    %c0_i32 = arith.constant 0 : i32
    %c0_i32_0 = arith.constant 0 : i32
    %c0_i32_1 = arith.constant 0 : i32
    return %c0_i32, %c0_i32_0 : i32, i32
  }
  func.func @transform_5(%arg0: i32) -> (i32, i32) {
    %c0_i32 = arith.constant 0 : i32
    %c0_i32_0 = arith.constant 0 : i32
    %c0_i32_1 = arith.constant 0 : i32
    return %c0_i32, %c0_i32_0 : i32, i32
  }
  func.func @transform_6(%arg0: i32) -> (i32, i32) {
    %c0_i32 = arith.constant 0 : i32
    %c0_i32_0 = arith.constant 0 : i32
    %c0_i32_1 = arith.constant 0 : i32
    return %c0_i32, %c0_i32_0 : i32, i32
  }
  func.func @transform_7(%arg0: i32) -> (i32, i32) {
    %c0_i32 = arith.constant 0 : i32
    %c0_i32_0 = arith.constant 0 : i32
    return %arg0, %c0_i32 : i32, i32
  }
}

module attributes {stable_mosaic.version = 11 : i64} {
  func.func @_propagate_kernel(%arg0: i32, %arg1: memref<64x128xbf16, #tpu.memory_space<vmem>>, %arg2: memref<128x128xbf16, #tpu.memory_space<vmem>>, %arg3: memref<64x4xf32, #tpu.memory_space<vmem>>, %arg4: memref<1x128xf32, #tpu.memory_space<vmem>>, %arg5: memref<1x128xf32, #tpu.memory_space<vmem>>, %arg6: memref<1x128xf32, #tpu.memory_space<vmem>>, %arg7: memref<1x128xf32, #tpu.memory_space<vmem>>, %arg8: memref<1x128xf32, #tpu.memory_space<vmem>>, %arg9: memref<64x128xf32, #tpu.memory_space<vmem>>, %arg10: memref<64x1xf32, #tpu.memory_space<vmem>>, %arg11: memref<1x128xf32, #tpu.memory_space<vmem>>) attributes {dimension_semantics = [#tpu.dimension_semantics<arbitrary>], iteration_bounds = array<i64: 2>, scalar_prefetch = 0 : i64, scratch_operands = 0 : i64, tpu.core_type = #tpu.core_type<tc>, window_params = [{transform_indices = @transform_0, window_bounds = array<i64: 64, 128>}, {pipeline_mode = #tpu.pipeline_mode<synchronous>, transform_indices = @transform_1, window_bounds = array<i64: 128, 128>}, {transform_indices = @transform_2, window_bounds = array<i64: 64, 4>}, {pipeline_mode = #tpu.pipeline_mode<synchronous>, transform_indices = @transform_3, window_bounds = array<i64: 1, 128>}, {pipeline_mode = #tpu.pipeline_mode<synchronous>, transform_indices = @transform_4, window_bounds = array<i64: 1, 128>}, {pipeline_mode = #tpu.pipeline_mode<synchronous>, transform_indices = @transform_5, window_bounds = array<i64: 1, 128>}, {pipeline_mode = #tpu.pipeline_mode<synchronous>, transform_indices = @transform_6, window_bounds = array<i64: 1, 128>}, {pipeline_mode = #tpu.pipeline_mode<synchronous>, transform_indices = @transform_7, window_bounds = array<i64: 1, 128>}, {transform_indices = @transform_8, window_bounds = array<i64: 64, 128>}, {transform_indices = @transform_9, window_bounds = array<i64: 64, 1>}, {pipeline_mode = #tpu.pipeline_mode<synchronous>, transform_indices = @transform_10, window_bounds = array<i64: 1, 128>}]} {
    %c0_i32 = arith.constant 0 : i32
    %0 = arith.cmpi eq, %arg0, %c0_i32 : i32
    %1 = arith.extui %0 : i1 to i32
    %c0_i32_0 = arith.constant 0 : i32
    %2 = arith.cmpi ne, %1, %c0_i32_0 : i32
    scf.if %2 {
      %cst_29 = arith.constant 0.000000e+00 : f32
      %48 = vector.broadcast %cst_29 : f32 to vector<1x128xf32>
      %c0_30 = arith.constant 0 : index
      %c0_31 = arith.constant 0 : index
      %49 = vector.load %arg11[%c0_30, %c0_31] : memref<1x128xf32, #tpu.memory_space<vmem>>, vector<1x128xf32>
      tpu.vector_store %arg11[%c0_30, %c0_31], %48 {strides = array<i32>} : memref<1x128xf32, #tpu.memory_space<vmem>>, vector<1x128xf32>,
    } else {
    }
    %c0 = arith.constant 0 : index
    %c0_1 = arith.constant 0 : index
    %3 = vector.load %arg1[%c0, %c0_1] : memref<64x128xbf16, #tpu.memory_space<vmem>>, vector<64x128xbf16>
    %c0_2 = arith.constant 0 : index
    %c0_3 = arith.constant 0 : index
    %4 = vector.load %arg2[%c0_2, %c0_3] : memref<128x128xbf16, #tpu.memory_space<vmem>>, vector<128x128xbf16>
    %cst = arith.constant dense<0.000000e+00> : vector<64x128xf32>
    %5 = tpu.matmul %3, %4, %cst {dimension_numbers = #tpu.dot_dimension_numbers<[1], [0], [0], [1], [0, 0, 1, 1], [], []>} : vector<64x128xbf16>, vector<128x128xbf16>, vector<64x128xf32> -> vector<64x128xf32>
    %c0_4 = arith.constant 0 : index
    %c0_5 = arith.constant 0 : index
    %6 = vector.load %arg3[%c0_4, %c0_5] : memref<64x4xf32, #tpu.memory_space<vmem>>, vector<64x4xf32>
    %7 = vector.extract_strided_slice %6 {offsets = [0, 1], sizes = [64, 1], strides = [1, 1]} : vector<64x4xf32> to vector<64x1xf32>
    %8 = vector.extract_strided_slice %6 {offsets = [0, 2], sizes = [64, 1], strides = [1, 1]} : vector<64x4xf32> to vector<64x1xf32>
    %c64_i32 = arith.constant 64 : i32
    %9 = arith.muli %arg0, %c64_i32 : i32
    %10 = tpu.assume_multiple %9, 64 : i32
    %11 = arith.index_cast %10 : i32 to index
    %c0_6 = arith.constant 0 : index
    %12 = vector.load %arg2[%11, %c0_6] : memref<128x128xbf16, #tpu.memory_space<vmem>>, vector<64x128xbf16>
    %13 = arith.extf %12 : vector<64x128xbf16> to vector<64x128xf32>
    %14 = arith.addf %5, %13 : vector<64x128xf32>
    %15 = vector.broadcast %8 : vector<64x1xf32> to vector<64x128xf32>
    %16 = arith.mulf %15, %14 : vector<64x128xf32>
    %c0_7 = arith.constant 0 : index
    %c0_8 = arith.constant 0 : index
    %17 = vector.load %arg4[%c0_7, %c0_8] : memref<1x128xf32, #tpu.memory_space<vmem>>, vector<1x128xf32>
    %18 = vector.broadcast %17 : vector<1x128xf32> to vector<64x128xf32>
    %19 = arith.addf %16, %18 : vector<64x128xf32>
    %c0_9 = arith.constant 0 : index
    %c0_10 = arith.constant 0 : index
    %20 = vector.load %arg5[%c0_9, %c0_10] : memref<1x128xf32, #tpu.memory_space<vmem>>, vector<1x128xf32>
    %21 = vector.broadcast %20 : vector<1x128xf32> to vector<64x128xf32>
    %22 = arith.mulf %19, %21 : vector<64x128xf32>
    %c0_11 = arith.constant 0 : index
    %c0_12 = arith.constant 0 : index
    %23 = vector.load %arg6[%c0_11, %c0_12] : memref<1x128xf32, #tpu.memory_space<vmem>>, vector<1x128xf32>
    %24 = vector.broadcast %23 : vector<1x128xf32> to vector<64x128xf32>
    %25 = arith.addf %22, %24 : vector<64x128xf32>
    %cst_13 = arith.constant 0.000000e+00 : f32
    %26 = vector.broadcast %cst_13 : f32 to vector<64x128xf32>
    %27 = arith.maximumf %25, %26 : vector<64x128xf32>
    %28 = vector.broadcast %7 : vector<64x1xf32> to vector<64x128xf32>
    %29 = arith.mulf %27, %28 : vector<64x128xf32>
    %c0_14 = arith.constant 0 : index
    %c0_15 = arith.constant 0 : index
    %30 = vector.load %arg9[%c0_14, %c0_15] : memref<64x128xf32, #tpu.memory_space<vmem>>, vector<64x128xf32>
    tpu.vector_store %arg9[%c0_14, %c0_15], %29 {strides = array<i32>} : memref<64x128xf32, #tpu.memory_space<vmem>>, vector<64x128xf32>,
    %c0_16 = arith.constant 0 : index
    %c0_17 = arith.constant 0 : index
    %31 = vector.load %arg7[%c0_16, %c0_17] : memref<1x128xf32, #tpu.memory_space<vmem>>, vector<1x128xf32>
    %32 = vector.broadcast %31 : vector<1x128xf32> to vector<64x128xf32>
    %33 = arith.mulf %29, %32 : vector<64x128xf32>
    %cst_18 = arith.constant dense<0.000000e+00> : vector<64xf32>
    %34 = vector.multi_reduction <add>, %33, %cst_18 [1] : vector<64x128xf32> to vector<64xf32>
    %35 = vector.shape_cast %34 : vector<64xf32> to vector<64x1xf32>
    %c0_19 = arith.constant 0 : index
    %c0_20 = arith.constant 0 : index
    %36 = vector.load %arg8[%c0_19, %c0_20] : memref<1x128xf32, #tpu.memory_space<vmem>>, vector<1x128xf32>
    %37 = vector.broadcast %36 : vector<1x128xf32> to vector<64x128xf32>
    %38 = arith.mulf %29, %37 : vector<64x128xf32>
    %cst_21 = arith.constant dense<0.000000e+00> : vector<64xf32>
    %39 = vector.multi_reduction <add>, %38, %cst_21 [1] : vector<64x128xf32> to vector<64xf32>
    %40 = vector.shape_cast %39 : vector<64xf32> to vector<64x1xf32>
    %c0_22 = arith.constant 0 : index
    %c0_23 = arith.constant 0 : index
    %41 = vector.load %arg10[%c0_22, %c0_23] : memref<64x1xf32, #tpu.memory_space<vmem>>, vector<64x1xf32>
    tpu.vector_store %arg10[%c0_22, %c0_23], %40 {strides = array<i32>} : memref<64x1xf32, #tpu.memory_space<vmem>>, vector<64x1xf32>,
    %42 = tpu.transpose %35, [1, 0] : vector<64x1xf32> -> vector<1x64xf32>
    %43 = arith.truncf %42 : vector<1x64xf32> to vector<1x64xbf16>
    %c0_24 = arith.constant 0 : index
    %c0_25 = arith.constant 0 : index
    %44 = vector.load %arg11[%c0_24, %c0_25] : memref<1x128xf32, #tpu.memory_space<vmem>>, vector<1x128xf32>
    %cst_26 = arith.constant dense<0.000000e+00> : vector<1x128xf32>
    %45 = tpu.matmul %43, %3, %cst_26 {dimension_numbers = #tpu.dot_dimension_numbers<[1], [0], [0], [1], [0, 0, 1, 1], [], []>} : vector<1x64xbf16>, vector<64x128xbf16>, vector<1x128xf32> -> vector<1x128xf32>
    %46 = arith.addf %44, %45 : vector<1x128xf32>
    %c0_27 = arith.constant 0 : index
    %c0_28 = arith.constant 0 : index
    %47 = vector.load %arg11[%c0_27, %c0_28] : memref<1x128xf32, #tpu.memory_space<vmem>>, vector<1x128xf32>
    tpu.vector_store %arg11[%c0_27, %c0_28], %46 {strides = array<i32>} : memref<1x128xf32, #tpu.memory_space<vmem>>, vector<1x128xf32>,
    return
  }
  func.func @transform_0(%arg0: i32) -> (i32, i32) {
    %c0_i32 = arith.constant 0 : i32
    %c0_i32_0 = arith.constant 0 : i32
    return %arg0, %c0_i32 : i32, i32
  }
  func.func @transform_1(%arg0: i32) -> (i32, i32) {
    %c0_i32 = arith.constant 0 : i32
    %c0_i32_0 = arith.constant 0 : i32
    %c0_i32_1 = arith.constant 0 : i32
    return %c0_i32, %c0_i32_0 : i32, i32
  }
  func.func @transform_2(%arg0: i32) -> (i32, i32) {
    %c0_i32 = arith.constant 0 : i32
    %c0_i32_0 = arith.constant 0 : i32
    return %arg0, %c0_i32 : i32, i32
  }
  func.func @transform_3(%arg0: i32) -> (i32, i32) {
    %c0_i32 = arith.constant 0 : i32
    %c0_i32_0 = arith.constant 0 : i32
    %c0_i32_1 = arith.constant 0 : i32
    return %c0_i32, %c0_i32_0 : i32, i32
  }
  func.func @transform_4(%arg0: i32) -> (i32, i32) {
    %c0_i32 = arith.constant 0 : i32
    %c0_i32_0 = arith.constant 0 : i32
    %c0_i32_1 = arith.constant 0 : i32
    return %c0_i32, %c0_i32_0 : i32, i32
  }
  func.func @transform_5(%arg0: i32) -> (i32, i32) {
    %c0_i32 = arith.constant 0 : i32
    %c0_i32_0 = arith.constant 0 : i32
    %c0_i32_1 = arith.constant 0 : i32
    return %c0_i32, %c0_i32_0 : i32, i32
  }
  func.func @transform_6(%arg0: i32) -> (i32, i32) {
    %c0_i32 = arith.constant 0 : i32
    %c0_i32_0 = arith.constant 0 : i32
    %c0_i32_1 = arith.constant 0 : i32
    return %c0_i32, %c0_i32_0 : i32, i32
  }
  func.func @transform_7(%arg0: i32) -> (i32, i32) {
    %c0_i32 = arith.constant 0 : i32
    %c0_i32_0 = arith.constant 0 : i32
    %c0_i32_1 = arith.constant 0 : i32
    return %c0_i32, %c0_i32_0 : i32, i32
  }
  func.func @transform_8(%arg0: i32) -> (i32, i32) {
    %c0_i32 = arith.constant 0 : i32
    %c0_i32_0 = arith.constant 0 : i32
    return %arg0, %c0_i32 : i32, i32
  }
  func.func @transform_9(%arg0: i32) -> (i32, i32) {
    %c0_i32 = arith.constant 0 : i32
    %c0_i32_0 = arith.constant 0 : i32
    return %arg0, %c0_i32 : i32, i32
  }
  func.func @transform_10(%arg0: i32) -> (i32, i32) {
    %c0_i32 = arith.constant 0 : i32
    %c0_i32_0 = arith.constant 0 : i32
    %c0_i32_1 = arith.constant 0 : i32
    return %c0_i32, %c0_i32_0 : i32, i32
  }
}

module attributes {stable_mosaic.version = 11 : i64} {
  func.func @_head_kernel(%arg0: i32, %arg1: memref<2x128xf32, #tpu.memory_space<vmem>>, %arg2: memref<128x128xf32, #tpu.memory_space<vmem>>, %arg3: memref<128x32xf32, #tpu.memory_space<vmem>>, %arg4: memref<1x32xf32, #tpu.memory_space<vmem>>, %arg5: memref<32x10xf32, #tpu.memory_space<vmem>>, %arg6: memref<1x10xf32, #tpu.memory_space<vmem>>, %arg7: memref<2x128xf32, #tpu.memory_space<vmem>>, %arg8: memref<2x32xf32, #tpu.memory_space<vmem>>, %arg9: memref<2x10xf32, #tpu.memory_space<vmem>>) attributes {dimension_semantics = [#tpu.dimension_semantics<arbitrary>], iteration_bounds = array<i64: 1>, scalar_prefetch = 0 : i64, scratch_operands = 0 : i64, tpu.core_type = #tpu.core_type<tc>, window_params = [{pipeline_mode = #tpu.pipeline_mode<synchronous>, transform_indices = @transform_0, window_bounds = array<i64: 2, 128>}, {pipeline_mode = #tpu.pipeline_mode<synchronous>, transform_indices = @transform_1, window_bounds = array<i64: 128, 128>}, {pipeline_mode = #tpu.pipeline_mode<synchronous>, transform_indices = @transform_2, window_bounds = array<i64: 128, 32>}, {pipeline_mode = #tpu.pipeline_mode<synchronous>, transform_indices = @transform_3, window_bounds = array<i64: 1, 32>}, {pipeline_mode = #tpu.pipeline_mode<synchronous>, transform_indices = @transform_4, window_bounds = array<i64: 32, 10>}, {pipeline_mode = #tpu.pipeline_mode<synchronous>, transform_indices = @transform_5, window_bounds = array<i64: 1, 10>}, {pipeline_mode = #tpu.pipeline_mode<synchronous>, transform_indices = @transform_6, window_bounds = array<i64: 2, 128>}, {pipeline_mode = #tpu.pipeline_mode<synchronous>, transform_indices = @transform_7, window_bounds = array<i64: 2, 32>}, {pipeline_mode = #tpu.pipeline_mode<synchronous>, transform_indices = @transform_8, window_bounds = array<i64: 2, 10>}]} {
    %c0 = arith.constant 0 : index
    %c0_0 = arith.constant 0 : index
    %0 = vector.load %arg1[%c0, %c0_0] : memref<2x128xf32, #tpu.memory_space<vmem>>, vector<2x128xf32>
    %c0_1 = arith.constant 0 : index
    %c0_2 = arith.constant 0 : index
    %1 = vector.load %arg2[%c0_1, %c0_2] : memref<128x128xf32, #tpu.memory_space<vmem>>, vector<128x128xf32>
    %cst = arith.constant dense<0.000000e+00> : vector<2x128xf32>
    %2 = tpu.matmul %0, %1, %cst {dimension_numbers = #tpu.dot_dimension_numbers<[1], [0], [0], [1], [0, 0, 1, 1], [], []>} : vector<2x128xf32>, vector<128x128xf32>, vector<2x128xf32> -> vector<2x128xf32>
    %c0_3 = arith.constant 0 : index
    %c0_4 = arith.constant 0 : index
    %3 = vector.load %arg7[%c0_3, %c0_4] : memref<2x128xf32, #tpu.memory_space<vmem>>, vector<2x128xf32>
    tpu.vector_store %arg7[%c0_3, %c0_4], %2 {strides = array<i32>} : memref<2x128xf32, #tpu.memory_space<vmem>>, vector<2x128xf32>,
    %c0_5 = arith.constant 0 : index
    %c0_6 = arith.constant 0 : index
    %4 = vector.load %arg3[%c0_5, %c0_6] : memref<128x32xf32, #tpu.memory_space<vmem>>, vector<128x32xf32>
    %cst_7 = arith.constant dense<0.000000e+00> : vector<2x32xf32>
    %5 = tpu.matmul %2, %4, %cst_7 {dimension_numbers = #tpu.dot_dimension_numbers<[1], [0], [0], [1], [0, 0, 1, 1], [], []>} : vector<2x128xf32>, vector<128x32xf32>, vector<2x32xf32> -> vector<2x32xf32>
    %c0_8 = arith.constant 0 : index
    %c0_9 = arith.constant 0 : index
    %6 = vector.load %arg4[%c0_8, %c0_9] : memref<1x32xf32, #tpu.memory_space<vmem>>, vector<1x32xf32>
    %7 = vector.broadcast %6 : vector<1x32xf32> to vector<2x32xf32>
    %8 = arith.addf %5, %7 : vector<2x32xf32>
    %c0_10 = arith.constant 0 : index
    %c0_11 = arith.constant 0 : index
    %9 = vector.load %arg8[%c0_10, %c0_11] : memref<2x32xf32, #tpu.memory_space<vmem>>, vector<2x32xf32>
    tpu.vector_store %arg8[%c0_10, %c0_11], %8 {strides = array<i32>} : memref<2x32xf32, #tpu.memory_space<vmem>>, vector<2x32xf32>,
    %cst_12 = arith.constant 0.000000e+00 : f32
    %10 = vector.broadcast %cst_12 : f32 to vector<2x32xf32>
    %11 = arith.maximumf %8, %10 : vector<2x32xf32>
    %c0_13 = arith.constant 0 : index
    %c0_14 = arith.constant 0 : index
    %12 = vector.load %arg5[%c0_13, %c0_14] : memref<32x10xf32, #tpu.memory_space<vmem>>, vector<32x10xf32>
    %cst_15 = arith.constant dense<0.000000e+00> : vector<2x10xf32>
    %13 = tpu.matmul %11, %12, %cst_15 {dimension_numbers = #tpu.dot_dimension_numbers<[1], [0], [0], [1], [0, 0, 1, 1], [], []>} : vector<2x32xf32>, vector<32x10xf32>, vector<2x10xf32> -> vector<2x10xf32>
    %c0_16 = arith.constant 0 : index
    %c0_17 = arith.constant 0 : index
    %14 = vector.load %arg6[%c0_16, %c0_17] : memref<1x10xf32, #tpu.memory_space<vmem>>, vector<1x10xf32>
    %15 = vector.broadcast %14 : vector<1x10xf32> to vector<2x10xf32>
    %16 = arith.addf %13, %15 : vector<2x10xf32>
    %c0_18 = arith.constant 0 : index
    %c0_19 = arith.constant 0 : index
    %17 = vector.load %arg9[%c0_18, %c0_19] : memref<2x10xf32, #tpu.memory_space<vmem>>, vector<2x10xf32>
    tpu.vector_store %arg9[%c0_18, %c0_19], %16 {strides = array<i32>} : memref<2x10xf32, #tpu.memory_space<vmem>>, vector<2x10xf32>,
    return
  }
  func.func @transform_0(%arg0: i32) -> (i32, i32) {
    %c0_i32 = arith.constant 0 : i32
    %c0_i32_0 = arith.constant 0 : i32
    %c0_i32_1 = arith.constant 0 : i32
    return %c0_i32, %c0_i32_0 : i32, i32
  }
  func.func @transform_1(%arg0: i32) -> (i32, i32) {
    %c0_i32 = arith.constant 0 : i32
    %c0_i32_0 = arith.constant 0 : i32
    %c0_i32_1 = arith.constant 0 : i32
    return %c0_i32, %c0_i32_0 : i32, i32
  }
  func.func @transform_2(%arg0: i32) -> (i32, i32) {
    %c0_i32 = arith.constant 0 : i32
    %c0_i32_0 = arith.constant 0 : i32
    %c0_i32_1 = arith.constant 0 : i32
    return %c0_i32, %c0_i32_0 : i32, i32
  }
  func.func @transform_3(%arg0: i32) -> (i32, i32) {
    %c0_i32 = arith.constant 0 : i32
    %c0_i32_0 = arith.constant 0 : i32
    %c0_i32_1 = arith.constant 0 : i32
    return %c0_i32, %c0_i32_0 : i32, i32
  }
  func.func @transform_4(%arg0: i32) -> (i32, i32) {
    %c0_i32 = arith.constant 0 : i32
    %c0_i32_0 = arith.constant 0 : i32
    %c0_i32_1 = arith.constant 0 : i32
    return %c0_i32, %c0_i32_0 : i32, i32
  }
  func.func @transform_5(%arg0: i32) -> (i32, i32) {
    %c0_i32 = arith.constant 0 : i32
    %c0_i32_0 = arith.constant 0 : i32
    %c0_i32_1 = arith.constant 0 : i32
    return %c0_i32, %c0_i32_0 : i32, i32
  }
  func.func @transform_6(%arg0: i32) -> (i32, i32) {
    %c0_i32 = arith.constant 0 : i32
    %c0_i32_0 = arith.constant 0 : i32
    %c0_i32_1 = arith.constant 0 : i32
    return %c0_i32, %c0_i32_0 : i32, i32
  }
  func.func @transform_7(%arg0: i32) -> (i32, i32) {
    %c0_i32 = arith.constant 0 : i32
    %c0_i32_0 = arith.constant 0 : i32
    %c0_i32_1 = arith.constant 0 : i32
    return %c0_i32, %c0_i32_0 : i32, i32
  }
  func.func @transform_8(%arg0: i32) -> (i32, i32) {
    %c0_i32 = arith.constant 0 : i32
    %c0_i32_0 = arith.constant 0 : i32
    %c0_i32_1 = arith.constant 0 : i32
    return %c0_i32, %c0_i32_0 : i32, i32
  }
}

</mosaic_0001>

<llo_original>
// kernel: mesh_cls_forward.5
$region0: #{mesh_cls_forward.5}
  #allocation0 [shape = 'u32[]', space=smem, size = 0x4, offset = 0x4, fixed_abs, tag = 'smem constant byte address 0x4 - core index']
  #allocation1 [shape = 'u32[144,128]{1,0:T(1,128)}', space=vmem, size = 0x12000, scoped, tag = 'internal scratch']
  %s0 = inlined_call_operand.vmem [shape: f32[128,128], index: 0, kind: input, shape index: {}]
  %s1 = inlined_call_operand.vmem [shape: f32[128,4], index: 1, kind: input, shape index: {}]
  %s2 = inlined_call_operand.vmem [shape: f32[128,128], index: 2, kind: input, shape index: {}]
  %s3 = inlined_call_operand.vmem [shape: f32[1,128], index: 3, kind: input, shape index: {}]
  %s4 = inlined_call_operand.vmem [shape: f32[1,128], index: 4, kind: input, shape index: {}]
  %s5 = inlined_call_operand.vmem [shape: f32[1,128], index: 5, kind: input, shape index: {}]
  %s6 = inlined_call_operand.vmem [shape: f32[128,128], index: 6, kind: input, shape index: {}]
  %s7 = inlined_call_operand.vmem [shape: bf16[128,128], index: 7, kind: output, shape index: {}]
  %s8 = sld [smem:[#allocation0]]
  $region61: #{mesh_cls_forward.5} parent=0
    _
  %s10 = ssub.s32 1, %s8
  %s11 = scalar_select 0, %s10, %s8
  loop: start=0, step=1, limit=4
  $region2: #{mesh_cls_forward.5} parent=0 // loop_pre_header
    _
  $region3: #{mesh_cls_forward.5} parent=0 // loop_header
    %s13 = sphi 0, %s17
    %p14 = scmp.ge.s32.totalorder %s13, 4
    %s23 = sphi 0, %s25
    %s26 = sphi 0, %s23
    %s27 = sphi 0, %s26
    %s43 = sphi 0, %s27
    %s49 = sphi 0, %s51
    %s52 = sphi 0, %s49
    %s53 = sphi 0, %s52
    %s69 = sphi 0, %s53
    %s73 = sphi 0, %s73
    %s75 = sphi 0, %s73
    %s76 = sphi 0, %s75
    %s90 = sphi 0, %s76
    %s94 = sphi 0, %s94
    %s96 = sphi 0, %s94
    %s97 = sphi 0, %s96
    %s111 = sphi 0, %s97
    %s115 = sphi 0, %s115
    %s117 = sphi 0, %s115
    %s118 = sphi 0, %s117
    %s132 = sphi 0, %s118
    %s136 = sphi 0, %s136
    %s138 = sphi 0, %s136
    %s139 = sphi 0, %s138
    %s153 = sphi 0, %s139
    %s157 = sphi 0, %s157
    %s159 = sphi 0, %s157
    %s160 = sphi 0, %s159
    %s174 = sphi 0, %s160
    %s180 = sphi 0, %s182
    %s183 = sphi 0, %s180
    %s184 = sphi 0, %s183
    %s200 = sphi 0, %s184
  $region4: #{mesh_cls_forward.5} parent=0 // loop_header_branch
    %16 = sbr.rel (%p14) target = $region8
  $region5: #{mesh_cls_forward.5} parent=0 // loop_body
    %s18 = ssub.s32 %s13, 1
    %s19 = ssub.s32 %s13, 2
    %s20 = sadd.s32 %s13, 1
    %s21 = ssub.s32 %s13, %s20
    %p22 = scmp.eq.s32.totalorder %s21, 0
    %s24 = sadd.s32 %s23, 1
    %s25 = scalar_select %p22, %s23, %s24
    %p28 = pneg %p22
    %p29 = scmp.eq.s32.totalorder %s13, 1
    %p30 = por %p28, %p29
    %p31 = scmp.ne.s32.totalorder %s23, %s26
    %p32 = scmp.eq.s32.totalorder %s13, 0
    %p33 = por %p31, %p32
    %p34 = scmp.ne.s32.totalorder %s23, %s26
    %p35 = scmp.eq.s32.totalorder %s18, 1
    %p36 = por %p34, %p35
    %p37 = scmp.ne.s32.totalorder %s26, %s27
    %p38 = scmp.eq.s32.totalorder %s18, 0
    %p39 = por %p37, %p38
    %p40 = scmp.ne.s32.totalorder %s26, %s27
    %p41 = scmp.eq.s32.totalorder %s19, 1
    %p42 = por %p40, %p41
    %p44 = scmp.ne.s32.totalorder %s27, %s43
    %p45 = scmp.eq.s32.totalorder %s19, 0
    %p46 = por %p44, %p45
    %s47 = ssub.s32 %s13, %s20
    %p48 = scmp.eq.s32.totalorder %s47, 0
    %s50 = sadd.s32 %s49, 1
    %s51 = scalar_select %p48, %s49, %s50
    %p54 = pneg %p48
    %p55 = scmp.eq.s32.totalorder %s13, 1
    %p56 = por %p54, %p55
    %p57 = scmp.ne.s32.totalorder %s49, %s52
    %p58 = scmp.eq.s32.totalorder %s13, 0
    %p59 = por %p57, %p58
    %p60 = scmp.ne.s32.totalorder %s49, %s52
    %p61 = scmp.eq.s32.totalorder %s18, 1
    %p62 = por %p60, %p61
    %p63 = scmp.ne.s32.totalorder %s52, %s53
    %p64 = scmp.eq.s32.totalorder %s18, 0
    %p65 = por %p63, %p64
    %p66 = scmp.ne.s32.totalorder %s52, %s53
    %p67 = scmp.eq.s32.totalorder %s19, 1
    %p68 = por %p66, %p67
    %p70 = scmp.ne.s32.totalorder %s53, %s69
    %p71 = scmp.eq.s32.totalorder %s19, 0
    %p72 = por %p70, %p71
    %s74 = sadd.s32 %s73, 1
    %p77 = scmp.eq.s32.totalorder %s13, 1
    %p78 = scmp.ne.s32.totalorder %s73, %s75
    %p79 = scmp.eq.s32.totalorder %s13, 0
    %p80 = por %p78, %p79
    %p81 = scmp.ne.s32.totalorder %s73, %s75
    %p82 = scmp.eq.s32.totalorder %s18, 1
    %p83 = por %p81, %p82
    %p84 = scmp.ne.s32.totalorder %s75, %s76
    %p85 = scmp.eq.s32.totalorder %s18, 0
    %p86 = por %p84, %p85
    %p87 = scmp.ne.s32.totalorder %s75, %s76
    %p88 = scmp.eq.s32.totalorder %s19, 1
    %p89 = por %p87, %p88
    %p91 = scmp.ne.s32.totalorder %s76, %s90
    %p92 = scmp.eq.s32.totalorder %s19, 0
    %p93 = por %p91, %p92
    %s95 = sadd.s32 %s94, 1
    %p98 = scmp.eq.s32.totalorder %s13, 1
    %p99 = scmp.ne.s32.totalorder %s94, %s96
    %p100 = scmp.eq.s32.totalorder %s13, 0
    %p101 = por %p99, %p100
    %p102 = scmp.ne.s32.totalorder %s94, %s96
    %p103 = scmp.eq.s32.totalorder %s18, 1
    %p104 = por %p102, %p103
    %p105 = scmp.ne.s32.totalorder %s96, %s97
    %p106 = scmp.eq.s32.totalorder %s18, 0
    %p107 = por %p105, %p106
    %p108 = scmp.ne.s32.totalorder %s96, %s97
    %p109 = scmp.eq.s32.totalorder %s19, 1
    %p110 = por %p108, %p109
    %p112 = scmp.ne.s32.totalorder %s97, %s111
    %p113 = scmp.eq.s32.totalorder %s19, 0
    %p114 = por %p112, %p113
    %s116 = sadd.s32 %s115, 1
    %p119 = scmp.eq.s32.totalorder %s13, 1
    %p120 = scmp.ne.s32.totalorder %s115, %s117
    %p121 = scmp.eq.s32.totalorder %s13, 0
    %p122 = por %p120, %p121
    %p123 = scmp.ne.s32.totalorder %s115, %s117
    %p124 = scmp.eq.s32.totalorder %s18, 1
    %p125 = por %p123, %p124
    %p126 = scmp.ne.s32.totalorder %s117, %s118
    %p127 = scmp.eq.s32.totalorder %s18, 0
    %p128 = por %p126, %p127
    %p129 = scmp.ne.s32.totalorder %s117, %s118
    %p130 = scmp.eq.s32.totalorder %s19, 1
    %p131 = por %p129, %p130
    %p133 = scmp.ne.s32.totalorder %s118, %s132
    %p134 = scmp.eq.s32.totalorder %s19, 0
    %p135 = por %p133, %p134
    %s137 = sadd.s32 %s136, 1
    %p140 = scmp.eq.s32.totalorder %s13, 1
    %p141 = scmp.ne.s32.totalorder %s136, %s138
    %p142 = scmp.eq.s32.totalorder %s13, 0
    %p143 = por %p141, %p142
    %p144 = scmp.ne.s32.totalorder %s136, %s138
    %p145 = scmp.eq.s32.totalorder %s18, 1
    %p146 = por %p144, %p145
    %p147 = scmp.ne.s32.totalorder %s138, %s139
    %p148 = scmp.eq.s32.totalorder %s18, 0
    %p149 = por %p147, %p148
    %p150 = scmp.ne.s32.totalorder %s138, %s139
    %p151 = scmp.eq.s32.totalorder %s19, 1
    %p152 = por %p150, %p151
    %p154 = scmp.ne.s32.totalorder %s139, %s153
    %p155 = scmp.eq.s32.totalorder %s19, 0
    %p156 = por %p154, %p155
    %s158 = sadd.s32 %s157, 1
    %p161 = scmp.eq.s32.totalorder %s13, 1
    %p162 = scmp.ne.s32.totalorder %s157, %s159
    %p163 = scmp.eq.s32.totalorder %s13, 0
    %p164 = por %p162, %p163
    %p165 = scmp.ne.s32.totalorder %s157, %s159
    %p166 = scmp.eq.s32.totalorder %s18, 1
    %p167 = por %p165, %p166
    %p168 = scmp.ne.s32.totalorder %s159, %s160
    %p169 = scmp.eq.s32.totalorder %s18, 0
    %p170 = por %p168, %p169
    %p171 = scmp.ne.s32.totalorder %s159, %s160
    %p172 = scmp.eq.s32.totalorder %s19, 1
    %p173 = por %p171, %p172
    %p175 = scmp.ne.s32.totalorder %s160, %s174
    %p176 = scmp.eq.s32.totalorder %s19, 0
    %p177 = por %p175, %p176
    %s178 = ssub.s32 %s13, %s20
    %p179 = scmp.eq.s32.totalorder %s178, 0
    %s181 = sadd.s32 %s180, 1
    %s182 = scalar_select %p179, %s180, %s181
    %p185 = pneg %p179
    %p186 = scmp.eq.s32.totalorder %s13, 1
    %p187 = por %p185, %p186
    %p188 = scmp.ne.s32.totalorder %s180, %s183
    %p189 = scmp.eq.s32.totalorder %s13, 0
    %p190 = por %p188, %p189
    %p191 = scmp.ne.s32.totalorder %s180, %s183
    %p192 = scmp.eq.s32.totalorder %s18, 1
    %p193 = por %p191, %p192
    %p194 = scmp.ne.s32.totalorder %s183, %s184
    %p195 = scmp.eq.s32.totalorder %s18, 0
    %p196 = por %p194, %p195
    %p197 = scmp.ne.s32.totalorder %s183, %s184
    %p198 = scmp.eq.s32.totalorder %s19, 1
    %p199 = por %p197, %p198
    %p201 = scmp.ne.s32.totalorder %s184, %s200
    %p202 = scmp.eq.s32.totalorder %s19, 0
    %p203 = por %p201, %p202
    %p204 = scmp.le.s32.totalorder 1, %s13
    %p205 = scmp.lt.s32.totalorder %s13, 3
    %p206 = pnand %p204, %p205
    %p207 = pneg %p206
    // Predicated region
    $region9: #{mesh_cls_forward.5} parent=5 // pred_check
      _
    $region10: #{mesh_cls_forward.5} parent=5 // pred_check_branch
      %209 = sbr.rel (%p206) target = $region12
    $region11: #{mesh_cls_forward.5} parent=5 // pred_region
      %s210 = ssub.s32 %s13, 1
      // Predicated region
      $region13: #{mesh_cls_forward.5} parent=11 // pred_check
        %p211 = pneg %p86
      $region14: #{mesh_cls_forward.5} parent=11 // pred_check_branch
        %213 = sbr.rel (%p211) target = $region16
      $region15: #{mesh_cls_forward.5} parent=11 // pred_region
        _
      $region16: #{mesh_cls_forward.5} parent=11 // pred_fallthru
        _
      // Predicated region
      $region17: #{mesh_cls_forward.5} parent=11 // pred_check
        %p214 = pneg %p107
      $region18: #{mesh_cls_forward.5} parent=11 // pred_check_branch
        %216 = sbr.rel (%p214) target = $region20
      $region19: #{mesh_cls_forward.5} parent=11 // pred_region
        _
      $region20: #{mesh_cls_forward.5} parent=11 // pred_fallthru
        _
      // Predicated region
      $region21: #{mesh_cls_forward.5} parent=11 // pred_check
        %p217 = pneg %p128
      $region22: #{mesh_cls_forward.5} parent=11 // pred_check_branch
        %219 = sbr.rel (%p217) target = $region24
      $region23: #{mesh_cls_forward.5} parent=11 // pred_region
        _
      $region24: #{mesh_cls_forward.5} parent=11 // pred_fallthru
        _
      // Predicated region
      $region25: #{mesh_cls_forward.5} parent=11 // pred_check
        %p220 = pneg %p149
      $region26: #{mesh_cls_forward.5} parent=11 // pred_check_branch
        %222 = sbr.rel (%p220) target = $region28
      $region27: #{mesh_cls_forward.5} parent=11 // pred_region
        _
      $region28: #{mesh_cls_forward.5} parent=11 // pred_fallthru
        _
      // Predicated region
      $region29: #{mesh_cls_forward.5} parent=11 // pred_check
        %p223 = pneg %p170
      $region30: #{mesh_cls_forward.5} parent=11 // pred_check_branch
        %225 = sbr.rel (%p223) target = $region32
      $region31: #{mesh_cls_forward.5} parent=11 // pred_region
        _
      $region32: #{mesh_cls_forward.5} parent=11 // pred_fallthru
        _
    $region12: #{mesh_cls_forward.5} parent=5 // pred_fallthru
      _
    %p226 = scmp.lt.s32.totalorder %s13, 2
    // Predicated region
    $region33: #{mesh_cls_forward.5} parent=5 // pred_check
      %p227 = pneg %p226
    $region34: #{mesh_cls_forward.5} parent=5 // pred_check_branch
      %229 = sbr.rel (%p227) target = $region36
    $region35: #{mesh_cls_forward.5} parent=5 // pred_region
      // Predicated region
      $region37: #{mesh_cls_forward.5} parent=35 // pred_check
        %p230 = pneg %p33
      $region38: #{mesh_cls_forward.5} parent=35 // pred_check_branch
        %232 = sbr.rel (%p230) target = $region40
      $region39: #{mesh_cls_forward.5} parent=35 // pred_region
        %s233 = smul.u32 8, %s13
        %p234 = scmp.lt.s32.totalorder %s233, 15
        %s235 = scalar_select %p234, %s233, 15
        %s236 = smul.addr %s235, 8
        %s237 = scalar_lea.vmem %s0, %s236
        %s238 = smul.u32 8, %s13
      $region40: #{mesh_cls_forward.5} parent=35 // pred_fallthru
        _
      // Predicated region
      $region41: #{mesh_cls_forward.5} parent=35 // pred_check
        %p239 = pneg %p59
      $region42: #{mesh_cls_forward.5} parent=35 // pred_check_branch
        %241 = sbr.rel (%p239) target = $region44
      $region43: #{mesh_cls_forward.5} parent=35 // pred_region
        %s242 = smul.u32 8, %s13
        %p243 = scmp.lt.s32.totalorder %s242, 15
        %s244 = scalar_select %p243, %s242, 15
        %s245 = smul.addr %s244, 8
        %s246 = scalar_lea.vmem %s1, %s245
        %s247 = smul.u32 8, %s13
      $region44: #{mesh_cls_forward.5} parent=35 // pred_fallthru
        _
    $region36: #{mesh_cls_forward.5} parent=5 // pred_fallthru
      _
    %p248 = scmp.le.s32.totalorder 1, %s13
    %p249 = scmp.lt.s32.totalorder %s13, 3
    %p250 = pnand %p248, %p249
    %p251 = pneg %p250
    // Predicated region
    $region45: #{mesh_cls_forward.5} parent=5 // pred_check
      _
    $region46: #{mesh_cls_forward.5} parent=5 // pred_check_branch
      %253 = sbr.rel (%p250) target = $region48
    $region47: #{mesh_cls_forward.5} parent=5 // pred_region
      %s254 = ssub.s32 %s13, 1
      %s255 = smul.u32 8, %s18
      %p256 = scmp.lt.s32.totalorder %s255, 15
      %s257 = scalar_select %p256, %s255, 15
      %s258 = smul.addr %s257, 8
      %s259 = scalar_lea.vmem %s0, %s258
      %p260 = pneg %p39
      %p261 = pneg %p36
      %s262 = smul.u32 8, %s18
      %p263 = scmp.lt.s32.totalorder %s262, 15
      %s264 = scalar_select %p263, %s262, 15
      %s265 = smul.addr %s264, 8
      %s266 = scalar_lea.vmem %s1, %s265
      %p267 = pneg %p65
      %p268 = pneg %p62
      %p269 = pneg %p86
      %p270 = pneg %p83
      %p271 = pneg %p107
      %p272 = pneg %p104
      %p273 = pneg %p128
      %p274 = pneg %p125
      %p275 = pneg %p149
      %p276 = pneg %p146
      %p277 = pneg %p170
      %p278 = pneg %p167
      %p279 = pneg %p196
      %p280 = pneg %p193
      %s281 = smul.u32 8, %s18
      %p282 = scmp.lt.s32.totalorder %s281, 15
      %s283 = scalar_select %p282, %s281, 15
      %s284 = smul.addr %s283, 4
      %s285 = scalar_lea.vmem %s7, %s284
      %s286 = smul.u32 8, %s18
      %p287 = scmp.lt.s32.totalorder %s286, 15
      %s288 = scalar_select %p287, %s286, 15
      %s289 = smul.addr %s288, 8
      %s290 = scalar_lea.vmem %s0, %s289
      %s291 = smul.u32 8, %s18
      %s292 = smul.u32 8, %s18
      %p293 = scmp.lt.s32.totalorder %s292, 15
      %s294 = scalar_select %p293, %s292, 15
      %s295 = smul.addr %s294, 8
      %s296 = scalar_lea.vmem %s1, %s295
      %s297 = smul.u32 8, %s18
      %s298 = smul.u32 8, %s18
      %p299 = scmp.lt.s32.totalorder %s298, 15
      %s300 = scalar_select %p299, %s298, 15
      %s301 = smul.addr %s300, 4
      %s302 = scalar_lea.vmem %s7, %s301
      %s303 = smul.u32 8, %s18
      %v304 = vld [vmem:[%s296] sm:$0xff]
      %v305 = vld [vmem:[%s296 + $0x8] sm:$0xff]
      %v306 = vld [vmem:[%s296 + $0x10] sm:$0xff]
      %v307 = vld [vmem:[%s296 + $0x18] sm:$0xff]
      %v308 = vld [vmem:[%s296 + $0x20] sm:$0xff]
      %v309 = vld [vmem:[%s296 + $0x28] sm:$0xff]
      %v310 = vld [vmem:[%s296 + $0x30] sm:$0xff]
      %v311 = vld [vmem:[%s296 + $0x38] sm:$0xff]
      %v312 = vld [vmem:[%s290] sm:$0xff]
      %v313 = vld [vmem:[%s290 + $0x8] sm:$0xff]
      %v314 = vld [vmem:[%s290 + $0x10] sm:$0xff]
      %v315 = vld [vmem:[%s290 + $0x18] sm:$0xff]
      %v316 = vld [vmem:[%s290 + $0x20] sm:$0xff]
      %v317 = vld [vmem:[%s290 + $0x28] sm:$0xff]
      %v318 = vld [vmem:[%s290 + $0x30] sm:$0xff]
      %v319 = vld [vmem:[%s290 + $0x38] sm:$0xff]
      %321 = vset.pattern.permute.xlu0 0
      %322 = vperm.xlu0 %321, %v304
      %v323 = vpop.permute.xlu0 %322
      %326 = vset.pattern.permute.xlu0 0
      %327 = vperm.xlu0 %326, %v305
      %v328 = vpop.permute.xlu0 %327
      %331 = vset.pattern.permute.xlu0 0
      %332 = vperm.xlu0 %331, %v306
      %v333 = vpop.permute.xlu0 %332
      %336 = vset.pattern.permute.xlu0 0
      %337 = vperm.xlu0 %336, %v307
      %v338 = vpop.permute.xlu0 %337
      %341 = vset.pattern.permute.xlu0 0
      %342 = vperm.xlu0 %341, %v308
      %v343 = vpop.permute.xlu0 %342
      %346 = vset.pattern.permute.xlu0 0
      %347 = vperm.xlu0 %346, %v309
      %v348 = vpop.permute.xlu0 %347
      %351 = vset.pattern.permute.xlu0 0
      %352 = vperm.xlu0 %351, %v310
      %v353 = vpop.permute.xlu0 %352
      %356 = vset.pattern.permute.xlu0 0
      %357 = vperm.xlu0 %356, %v311
      %v358 = vpop.permute.xlu0 %357
      %v360 = vmul.f32 %v312, %v323
      %v361 = vmul.f32 %v313, %v328
      %v362 = vmul.f32 %v314, %v333
      %v363 = vmul.f32 %v315, %v338
      %v364 = vmul.f32 %v316, %v343
      %v365 = vmul.f32 %v317, %v348
      %v366 = vmul.f32 %v318, %v353
      %v367 = vmul.f32 %v319, %v358
      %v368 = vld [vmem:[%s2] sm:$0xff]
      %v369 = vld [vmem:[%s2 + $0x8] sm:$0xff]
      %v370 = vld [vmem:[%s2 + $0x10] sm:$0xff]
      %v371 = vld [vmem:[%s2 + $0x18] sm:$0xff]
      %v372 = vld [vmem:[%s2 + $0x20] sm:$0xff]
      %v373 = vld [vmem:[%s2 + $0x28] sm:$0xff]
      %v374 = vld [vmem:[%s2 + $0x30] sm:$0xff]
      %v375 = vld [vmem:[%s2 + $0x38] sm:$0xff]
      %v376 = vld [vmem:[%s2 + $0x40] sm:$0xff]
      %v377 = vld [vmem:[%s2 + $0x48] sm:$0xff]
      %v378 = vld [vmem:[%s2 + $0x50] sm:$0xff]
      %v379 = vld [vmem:[%s2 + $0x58] sm:$0xff]
      %v380 = vld [vmem:[%s2 + $0x60] sm:$0xff]
      %v381 = vld [vmem:[%s2 + $0x68] sm:$0xff]
      %v382 = vld [vmem:[%s2 + $0x70] sm:$0xff]
      %v383 = vld [vmem:[%s2 + $0x78] sm:$0xff]
      %v384 = vld [vmem:[%s3] sm:$0x1]
      %v386 = vlaneseq
      %v387 = vshrl.u32 %v386, 7
      %v388 = vsub.s32 0, %v387
      %v389 = vrot.slane %v384, %v388
      %391 = vmatprep.subr.mxu0 0.0
      %392 = vmatpush1.msra.mxu0 %v368
      %393 = vmatprep.subr.mxu0 0.0
      %394 = vmatpush1.msra.mxu0 %v369
      %395 = vmatprep.subr.mxu0 0.0
      %396 = vmatpush1.msra.mxu0 %v370
      %397 = vmatprep.subr.mxu0 0.0
      %398 = vmatpush1.msra.mxu0 %v371
      %399 = vmatprep.subr.mxu0 0.0
      %400 = vmatpush1.msra.mxu0 %v372
      %401 = vmatprep.subr.mxu0 0.0
      %402 = vmatpush1.msra.mxu0 %v373
      %403 = vmatprep.subr.mxu0 0.0
      %404 = vmatpush1.msra.mxu0 %v374
      %405 = vmatprep.subr.mxu0 0.0
      %406 = vmatpush1.msra.mxu0 %v375
      %407 = vmatprep.subr.mxu0 0.0
      %408 = vmatpush1.msra.mxu0 %v376
      %409 = vmatprep.subr.mxu0 0.0
      %410 = vmatpush1.msra.mxu0 %v377
      %411 = vmatprep.subr.mxu0 0.0
      %412 = vmatpush1.msra.mxu0 %v378
      %413 = vmatprep.subr.mxu0 0.0
      %414 = vmatpush1.msra.mxu0 %v379
      %415 = vmatprep.subr.mxu0 0.0
      %416 = vmatpush1.msra.mxu0 %v380
      %417 = vmatprep.subr.mxu0 0.0
      %418 = vmatpush1.msra.mxu0 %v381
      %419 = vmatprep.subr.mxu0 0.0
      %420 = vmatpush1.msra.mxu0 %v382
      %421 = vmatprep.subr.mxu0 0.0
      %422 = vmatpush1.msra.mxu0 %v383
      %423 = vmatprep.subr.mxu0 0.0
      %424 = vmatpush1.msra.mxu0 0.0
      %425 = vmatprep.subr.mxu0 0.0
      %426 = vmatpush1.msra.mxu0 0.0
      %427 = vmatprep.subr.mxu0 0.0
      %428 = vmatpush1.msra.mxu0 0.0
      %429 = vmatprep.subr.mxu0 0.0
      %430 = vmatpush1.msra.mxu0 0.0
      %431 = vmatprep.subr.mxu0 0.0
      %432 = vmatpush1.msra.mxu0 0.0
      %433 = vmatprep.subr.mxu0 0.0
      %434 = vmatpush1.msra.mxu0 0.0
      %435 = vmatprep.subr.mxu0 0.0
      %436 = vmatpush1.msra.mxu0 0.0
      %437 = vmatprep.subr.mxu0 0.0
      %438 = vmatpush1.msra.mxu0 0.0
      %439 = vmatprep.subr.mxu0 0.0
      %440 = vmatpush1.msra.mxu0 0.0
      %441 = vmatprep.subr.mxu0 0.0
      %442 = vmatpush1.msra.mxu0 0.0
      %443 = vmatprep.subr.mxu0 0.0
      %444 = vmatpush1.msra.mxu0 0.0
      %445 = vmatprep.subr.mxu0 0.0
      %446 = vmatpush1.msra.mxu0 0.0
      %447 = vmatprep.subr.mxu0 0.0
      %448 = vmatpush1.msra.mxu0 0.0
      %449 = vmatprep.subr.mxu0 0.0
      %450 = vmatpush1.msra.mxu0 0.0
      %451 = vmatprep.subr.mxu0 0.0
      %452 = vmatpush1.msra.mxu0 0.0
      %453 = vmatprep.subr.mxu0 0.0
      %454 = vmatpush1.msra.mxu0 0.0
      %455 = vmatprep.mubr.f32.mxu0 0.0
      %456 = vmatmul.mubr.f32.gmra.mrb[0].mxu0 %v360
      %v457 = vpop.f32.mrb[0].mxu0
      %v458 = vadd.f32 %v389, %v457
      %v459 = vpop.f32.mrb[0].mxu0
      %460 = vmatprep.mubr.f32.mxu0 0.0
      %461 = vmatmul.mubr.f32.gmra.mrb[0].mxu0 %v361
      %v462 = vpop.f32.mrb[0].mxu0
      %v463 = vadd.f32 %v389, %v462
      %v464 = vpop.f32.mrb[0].mxu0
      %465 = vmatprep.mubr.f32.mxu0 0.0
      %466 = vmatmul.mubr.f32.gmra.mrb[0].mxu0 %v362
      %v467 = vpop.f32.mrb[0].mxu0
      %v468 = vadd.f32 %v389, %v467
      %v469 = vpop.f32.mrb[0].mxu0
      %470 = vmatprep.mubr.f32.mxu0 0.0
      %471 = vmatmul.mubr.f32.gmra.mrb[0].mxu0 %v363
      %v472 = vpop.f32.mrb[0].mxu0
      %v473 = vadd.f32 %v389, %v472
      %v474 = vpop.f32.mrb[0].mxu0
      %475 = vmatprep.mubr.f32.mxu0 0.0
      %476 = vmatmul.mubr.f32.gmra.mrb[0].mxu0 %v364
      %v477 = vpop.f32.mrb[0].mxu0
      %v478 = vadd.f32 %v389, %v477
      %v479 = vpop.f32.mrb[0].mxu0
      %480 = vmatprep.mubr.f32.mxu0 0.0
      %481 = vmatmul.mubr.f32.gmra.mrb[0].mxu0 %v365
      %v482 = vpop.f32.mrb[0].mxu0
      %v483 = vadd.f32 %v389, %v482
      %v484 = vpop.f32.mrb[0].mxu0
      %485 = vmatprep.mubr.f32.mxu0 0.0
      %486 = vmatmul.mubr.f32.gmra.mrb[0].mxu0 %v366
      %v487 = vpop.f32.mrb[0].mxu0
      %v488 = vadd.f32 %v389, %v487
      %v489 = vpop.f32.mrb[0].mxu0
      %490 = vmatprep.mubr.f32.mxu0 0.0
      %491 = vmatmul.mubr.f32.gmra.mrb[0].mxu0 %v367
      %v492 = vpop.f32.mrb[0].mxu0
      %v493 = vadd.f32 %v389, %v492
      %v494 = vpop.f32.mrb[0].mxu0
      %495 = vdwg.mxu0
      %v496 = vmax.f32 %v458, 0.0
      %v497 = vmax.f32 %v463, 0.0
      %v498 = vmax.f32 %v468, 0.0
      %v499 = vmax.f32 %v473, 0.0
      %v500 = vmax.f32 %v478, 0.0
      %v501 = vmax.f32 %v483, 0.0
      %v502 = vmax.f32 %v488, 0.0
      %v503 = vmax.f32 %v493, 0.0
      %v504 = vld [vmem:[%s4] sm:$0x1]
      %v506 = vlaneseq
      %v507 = vshrl.u32 %v506, 7
      %v508 = vsub.s32 0, %v507
      %v509 = vrot.slane %v504, %v508
      %v511 = vmul.f32 %v496, %v509
      %v512 = vmul.f32 %v497, %v509
      %v513 = vmul.f32 %v498, %v509
      %v514 = vmul.f32 %v499, %v509
      %v515 = vmul.f32 %v500, %v509
      %v516 = vmul.f32 %v501, %v509
      %v517 = vmul.f32 %v502, %v509
      %v518 = vmul.f32 %v503, %v509
      %v519 = vld [vmem:[%s5] sm:$0x1]
      %v521 = vlaneseq
      %v522 = vshrl.u32 %v521, 7
      %v523 = vsub.s32 0, %v522
      %v524 = vrot.slane %v519, %v523
      %v526 = vadd.f32 %v511, %v524
      %v527 = vadd.f32 %v512, %v524
      %v528 = vadd.f32 %v513, %v524
      %v529 = vadd.f32 %v514, %v524
      %v530 = vadd.f32 %v515, %v524
      %v531 = vadd.f32 %v516, %v524
      %v532 = vadd.f32 %v517, %v524
      %v533 = vadd.f32 %v518, %v524
      %v534 = vld [vmem:[%s6] sm:$0xff]
      %v535 = vld [vmem:[%s6 + $0x8] sm:$0xff]
      %v536 = vld [vmem:[%s6 + $0x10] sm:$0xff]
      %v537 = vld [vmem:[%s6 + $0x18] sm:$0xff]
      %v538 = vld [vmem:[%s6 + $0x20] sm:$0xff]
      %v539 = vld [vmem:[%s6 + $0x28] sm:$0xff]
      %v540 = vld [vmem:[%s6 + $0x30] sm:$0xff]
      %v541 = vld [vmem:[%s6 + $0x38] sm:$0xff]
      %v542 = vld [vmem:[%s6 + $0x40] sm:$0xff]
      %v543 = vld [vmem:[%s6 + $0x48] sm:$0xff]
      %v544 = vld [vmem:[%s6 + $0x50] sm:$0xff]
      %v545 = vld [vmem:[%s6 + $0x58] sm:$0xff]
      %v546 = vld [vmem:[%s6 + $0x60] sm:$0xff]
      %v547 = vld [vmem:[%s6 + $0x68] sm:$0xff]
      %v548 = vld [vmem:[%s6 + $0x70] sm:$0xff]
      %v549 = vld [vmem:[%s6 + $0x78] sm:$0xff]
      %550 = vmatprep.subr.mxu0 0.0
      %551 = vmatpush1.msra.mxu0 %v534
      %552 = vmatprep.subr.mxu0 0.0
      %553 = vmatpush1.msra.mxu0 %v535
      %554 = vmatprep.subr.mxu0 0.0
      %555 = vmatpush1.msra.mxu0 %v536
      %556 = vmatprep.subr.mxu0 0.0
      %557 = vmatpush1.msra.mxu0 %v537
      %558 = vmatprep.subr.mxu0 0.0
      %559 = vmatpush1.msra.mxu0 %v538
      %560 = vmatprep.subr.mxu0 0.0
      %561 = vmatpush1.msra.mxu0 %v539
      %562 = vmatprep.subr.mxu0 0.0
      %563 = vmatpush1.msra.mxu0 %v540
      %564 = vmatprep.subr.mxu0 0.0
      %565 = vmatpush1.msra.mxu0 %v541
      %566 = vmatprep.subr.mxu0 0.0
      %567 = vmatpush1.msra.mxu0 %v542
      %568 = vmatprep.subr.mxu0 0.0
      %569 = vmatpush1.msra.mxu0 %v543
      %570 = vmatprep.subr.mxu0 0.0
      %571 = vmatpush1.msra.mxu0 %v544
      %572 = vmatprep.subr.mxu0 0.0
      %573 = vmatpush1.msra.mxu0 %v545
      %574 = vmatprep.subr.mxu0 0.0
      %575 = vmatpush1.msra.mxu0 %v546
      %576 = vmatprep.subr.mxu0 0.0
      %577 = vmatpush1.msra.mxu0 %v547
      %578 = vmatprep.subr.mxu0 0.0
      %579 = vmatpush1.msra.mxu0 %v548
      %580 = vmatprep.subr.mxu0 0.0
      %581 = vmatpush1.msra.mxu0 %v549
      %582 = vmatprep.subr.mxu0 0.0
      %583 = vmatpush1.msra.mxu0 0.0
      %584 = vmatprep.subr.mxu0 0.0
      %585 = vmatpush1.msra.mxu0 0.0
      %586 = vmatprep.subr.mxu0 0.0
      %587 = vmatpush1.msra.mxu0 0.0
      %588 = vmatprep.subr.mxu0 0.0
      %589 = vmatpush1.msra.mxu0 0.0
      %590 = vmatprep.subr.mxu0 0.0
      %591 = vmatpush1.msra.mxu0 0.0
      %592 = vmatprep.subr.mxu0 0.0
      %593 = vmatpush1.msra.mxu0 0.0
      %594 = vmatprep.subr.mxu0 0.0
      %595 = vmatpush1.msra.mxu0 0.0
      %596 = vmatprep.subr.mxu0 0.0
      %597 = vmatpush1.msra.mxu0 0.0
      %598 = vmatprep.subr.mxu0 0.0
      %599 = vmatpush1.msra.mxu0 0.0
      %600 = vmatprep.subr.mxu0 0.0
      %601 = vmatpush1.msra.mxu0 0.0
      %602 = vmatprep.subr.mxu0 0.0
      %603 = vmatpush1.msra.mxu0 0.0
      %604 = vmatprep.subr.mxu0 0.0
      %605 = vmatpush1.msra.mxu0 0.0
      %606 = vmatprep.subr.mxu0 0.0
      %607 = vmatpush1.msra.mxu0 0.0
      %608 = vmatprep.subr.mxu0 0.0
      %609 = vmatpush1.msra.mxu0 0.0
      %610 = vmatprep.subr.mxu0 0.0
      %611 = vmatpush1.msra.mxu0 0.0
      %612 = vmatprep.subr.mxu0 0.0
      %613 = vmatpush1.msra.mxu0 0.0
      %614 = vmatprep.mubr.f32.mxu0 0.0
      %615 = vmatmul.mubr.f32.gmra.mrb[0].mxu0 %v526
      %v616 = vpop.f32.mrb[0].mxu0
      %v617 = vadd.f32 0.0, %v616
      %v618 = vpop.f32.mrb[0].mxu0
      %619 = vmatprep.mubr.f32.mxu0 0.0
      %620 = vmatmul.mubr.f32.gmra.mrb[0].mxu0 %v527
      %v621 = vpop.f32.mrb[0].mxu0
      %v622 = vadd.f32 0.0, %v621
      %v623 = vpop.f32.mrb[0].mxu0
      %624 = vmatprep.mubr.f32.mxu0 0.0
      %625 = vmatmul.mubr.f32.gmra.mrb[0].mxu0 %v528
      %v626 = vpop.f32.mrb[0].mxu0
      %v627 = vadd.f32 0.0, %v626
      %v628 = vpop.f32.mrb[0].mxu0
      %629 = vmatprep.mubr.f32.mxu0 0.0
      %630 = vmatmul.mubr.f32.gmra.mrb[0].mxu0 %v529
      %v631 = vpop.f32.mrb[0].mxu0
      %v632 = vadd.f32 0.0, %v631
      %v633 = vpop.f32.mrb[0].mxu0
      %634 = vmatprep.mubr.f32.mxu0 0.0
      %635 = vmatmul.mubr.f32.gmra.mrb[0].mxu0 %v530
      %v636 = vpop.f32.mrb[0].mxu0
      %v637 = vadd.f32 0.0, %v636
      %v638 = vpop.f32.mrb[0].mxu0
      %639 = vmatprep.mubr.f32.mxu0 0.0
      %640 = vmatmul.mubr.f32.gmra.mrb[0].mxu0 %v531
      %v641 = vpop.f32.mrb[0].mxu0
      %v642 = vadd.f32 0.0, %v641
      %v643 = vpop.f32.mrb[0].mxu0
      %644 = vmatprep.mubr.f32.mxu0 0.0
      %645 = vmatmul.mubr.f32.gmra.mrb[0].mxu0 %v532
      %v646 = vpop.f32.mrb[0].mxu0
      %v647 = vadd.f32 0.0, %v646
      %v648 = vpop.f32.mrb[0].mxu0
      %649 = vmatprep.mubr.f32.mxu0 0.0
      %650 = vmatmul.mubr.f32.gmra.mrb[0].mxu0 %v533
      %v651 = vpop.f32.mrb[0].mxu0
      %v652 = vadd.f32 0.0, %v651
      %v653 = vpop.f32.mrb[0].mxu0
      %654 = vdwg.mxu0
      %655 = vset.pattern.permute.xlu0 2
      %656 = vperm.xlu0 %655, %v304
      %v657 = vpop.permute.xlu0 %656
      %659 = vset.pattern.permute.xlu0 2
      %660 = vperm.xlu0 %659, %v305
      %v661 = vpop.permute.xlu0 %660
      %663 = vset.pattern.permute.xlu0 2
      %664 = vperm.xlu0 %663, %v306
      %v665 = vpop.permute.xlu0 %664
      %667 = vset.pattern.permute.xlu0 2
      %668 = vperm.xlu0 %667, %v307
      %v669 = vpop.permute.xlu0 %668
      %671 = vset.pattern.permute.xlu0 2
      %672 = vperm.xlu0 %671, %v308
      %v673 = vpop.permute.xlu0 %672
      %675 = vset.pattern.permute.xlu0 2
      %676 = vperm.xlu0 %675, %v309
      %v677 = vpop.permute.xlu0 %676
      %679 = vset.pattern.permute.xlu0 2
      %680 = vperm.xlu0 %679, %v310
      %v681 = vpop.permute.xlu0 %680
      %683 = vset.pattern.permute.xlu0 2
      %684 = vperm.xlu0 %683, %v311
      %v685 = vpop.permute.xlu0 %684
      %v687 = vmul.f32 %v617, %v657
      %v688 = vmul.f32 %v622, %v661
      %v689 = vmul.f32 %v627, %v665
      %v690 = vmul.f32 %v632, %v669
      %v691 = vmul.f32 %v637, %v673
      %v692 = vmul.f32 %v642, %v677
      %v693 = vmul.f32 %v647, %v681
      %v694 = vmul.f32 %v652, %v685
      %v695 = vpack.c.bf16 %v688, %v687
      %v696 = vpack.c.bf16 %v690, %v689
      %v697 = vpack.c.bf16 %v692, %v691
      %v698 = vpack.c.bf16 %v694, %v693
      %v703 = vunpack.c.l.b16 %v695
      %v704 = vunpack.c.h.b16 %v695
      %v705 = vunpack.c.l.b16 %v696
      %v706 = vunpack.c.h.b16 %v696
      %v707 = vunpack.c.l.b16 %v697
      %v708 = vunpack.c.h.b16 %v697
      %v709 = vunpack.c.l.b16 %v698
      %v710 = vunpack.c.h.b16 %v698
      %v711 = vpack.c.b16 %v703, %v703
      %v712 = vpack.c.b16 %v704, %v704
      %v713 = vpack.c.b16 %v705, %v705
      %v714 = vpack.c.b16 %v706, %v706
      %v715 = vpack.c.b16 %v707, %v707
      %v716 = vpack.c.b16 %v708, %v708
      %v717 = vpack.c.b16 %v709, %v709
      %v718 = vpack.c.b16 %v710, %v710
      %727 = vst [vmem:[%s302] sm:$0xf] %v711
      %728 = vst [vmem:[%s302 + $0x4] sm:$0xf] %v712
      %729 = vst [vmem:[%s302 + $0x8] sm:$0xf] %v713
      %730 = vst [vmem:[%s302 + $0xc] sm:$0xf] %v714
      %731 = vst [vmem:[%s302 + $0x10] sm:$0xf] %v715
      %732 = vst [vmem:[%s302 + $0x14] sm:$0xf] %v716
      %733 = vst [vmem:[%s302 + $0x18] sm:$0xf] %v717
      %734 = vst [vmem:[%s302 + $0x1c] sm:$0xf] %v718
      %s735 = smul.u32 8, %s18
      %p736 = scmp.lt.s32.totalorder %s735, 15
      %s737 = scalar_select %p736, %s735, 15
      %s738 = smul.addr %s737, 4
      %s739 = scalar_lea.vmem %s7, %s738
      // Predicated region
      $region49: #{mesh_cls_forward.5} parent=47 // pred_check
        %p740 = pneg %p193
      $region50: #{mesh_cls_forward.5} parent=47 // pred_check_branch
        %742 = sbr.rel (%p740) target = $region52
      $region51: #{mesh_cls_forward.5} parent=47 // pred_region
        %s743 = smul.u32 8, %s18
      $region52: #{mesh_cls_forward.5} parent=47 // pred_fallthru
        _
    $region48: #{mesh_cls_forward.5} parent=5 // pred_fallthru
      _
    %p744 = scmp.le.s32.totalorder 2, %s13
    // Predicated region
    $region53: #{mesh_cls_forward.5} parent=5 // pred_check
      %p745 = pneg %p744
    $region54: #{mesh_cls_forward.5} parent=5 // pred_check_branch
      %747 = sbr.rel (%p745) target = $region56
    $region55: #{mesh_cls_forward.5} parent=5 // pred_region
      %s748 = ssub.s32 %s13, 2
      // Predicated region
      $region57: #{mesh_cls_forward.5} parent=55 // pred_check
        %p749 = pneg %p199
      $region58: #{mesh_cls_forward.5} parent=55 // pred_check_branch
        %751 = sbr.rel (%p749) target = $region60
      $region59: #{mesh_cls_forward.5} parent=55 // pred_region
        %s752 = smul.u32 8, %s19
        %p753 = scmp.lt.s32.totalorder %s752, 15
        %s754 = scalar_select %p753, %s752, 15
        %s755 = smul.addr %s754, 4
        %s756 = scalar_lea.vmem %s7, %s755
      $region60: #{mesh_cls_forward.5} parent=55 // pred_fallthru
        _
    $region56: #{mesh_cls_forward.5} parent=5 // pred_fallthru
      _
  $region6: #{mesh_cls_forward.5} parent=0 // loop_footer
    %s17 = sadd.s32 1, %s13
  $region7: #{mesh_cls_forward.5} parent=0 // loop_footer_branch
    %12 = sbr.rel target = $region3
  $region8: #{mesh_cls_forward.5} parent=0 // loop_exit
    _

// kernel: mesh_cls_forward.6
$region0: #{mesh_cls_forward.6}
  #allocation0 [shape = 'u32[]', space=smem, size = 0x4, offset = 0x4, fixed_abs, tag = 'smem constant byte address 0x4 - core index']
  #allocation1 [shape = 'u32[144,128]{1,0:T(1,128)}', space=vmem, size = 0x12000, scoped, tag = 'internal scratch']
  %s0 = inlined_call_operand.vmem [shape: bf16[128,128], index: 0, kind: input, shape index: {}]
  %s1 = inlined_call_operand.vmem [shape: bf16[128,128], index: 1, kind: input, shape index: {}]
  %s2 = inlined_call_operand.vmem [shape: f32[128,4], index: 2, kind: input, shape index: {}]
  %s3 = inlined_call_operand.vmem [shape: f32[1,128], index: 3, kind: input, shape index: {}]
  %s4 = inlined_call_operand.vmem [shape: f32[1,128], index: 4, kind: input, shape index: {}]
  %s5 = inlined_call_operand.vmem [shape: f32[1,128], index: 5, kind: input, shape index: {}]
  %s6 = inlined_call_operand.vmem [shape: f32[1,128], index: 6, kind: input, shape index: {}]
  %s7 = inlined_call_operand.vmem [shape: f32[1,128], index: 7, kind: input, shape index: {}]
  %s8 = inlined_call_operand.vmem [shape: f32[128,128], index: 8, kind: output, shape index: {0}]
  %s9 = inlined_call_operand.vmem [shape: f32[128,1], index: 9, kind: output, shape index: {1}]
  %s10 = inlined_call_operand.vmem [shape: f32[1,128], index: 10, kind: output, shape index: {2}]
  %11 = xla_tuple %s8, %s9, %s10
  %s12 = sld [smem:[#allocation0]]
  $region85: #{mesh_cls_forward.6} parent=0
    _
  %s14 = ssub.s32 1, %s12
  %s15 = scalar_select 0, %s14, %s12
  loop: start=0, step=1, limit=4
  $region2: #{mesh_cls_forward.6} parent=0 // loop_pre_header
    _
  $region3: #{mesh_cls_forward.6} parent=0 // loop_header
    %s17 = sphi 0, %s21
    %p18 = scmp.ge.s32.totalorder %s17, 4
    %s27 = sphi 0, %s29
    %s30 = sphi 0, %s27
    %s31 = sphi 0, %s30
    %s47 = sphi 0, %s31
    %s51 = sphi 0, %s51
    %s53 = sphi 0, %s51
    %s54 = sphi 0, %s53
    %s68 = sphi 0, %s54
    %s74 = sphi 0, %s76
    %s77 = sphi 0, %s74
    %s78 = sphi 0, %s77
    %s94 = sphi 0, %s78
    %s98 = sphi 0, %s98
    %s100 = sphi 0, %s98
    %s101 = sphi 0, %s100
    %s115 = sphi 0, %s101
    %s119 = sphi 0, %s119
    %s121 = sphi 0, %s119
    %s122 = sphi 0, %s121
    %s136 = sphi 0, %s122
    %s140 = sphi 0, %s140
    %s142 = sphi 0, %s140
    %s143 = sphi 0, %s142
    %s157 = sphi 0, %s143
    %s161 = sphi 0, %s161
    %s163 = sphi 0, %s161
    %s164 = sphi 0, %s163
    %s178 = sphi 0, %s164
    %s182 = sphi 0, %s182
    %s184 = sphi 0, %s182
    %s185 = sphi 0, %s184
    %s199 = sphi 0, %s185
    %s205 = sphi 0, %s207
    %s208 = sphi 0, %s205
    %s209 = sphi 0, %s208
    %s225 = sphi 0, %s209
    %s231 = sphi 0, %s233
    %s234 = sphi 0, %s231
    %s235 = sphi 0, %s234
    %s251 = sphi 0, %s235
    %s255 = sphi 0, %s255
    %s257 = sphi 0, %s255
    %s258 = sphi 0, %s257
    %s272 = sphi 0, %s258
  $region4: #{mesh_cls_forward.6} parent=0 // loop_header_branch
    %20 = sbr.rel (%p18) target = $region8
  $region5: #{mesh_cls_forward.6} parent=0 // loop_body
    %s22 = ssub.s32 %s17, 1
    %s23 = ssub.s32 %s17, 2
    %s24 = sadd.s32 %s17, 1
    %s25 = ssub.s32 %s17, %s24
    %p26 = scmp.eq.s32.totalorder %s25, 0
    %s28 = sadd.s32 %s27, 1
    %s29 = scalar_select %p26, %s27, %s28
    %p32 = pneg %p26
    %p33 = scmp.eq.s32.totalorder %s17, 1
    %p34 = por %p32, %p33
    %p35 = scmp.ne.s32.totalorder %s27, %s30
    %p36 = scmp.eq.s32.totalorder %s17, 0
    %p37 = por %p35, %p36
    %p38 = scmp.ne.s32.totalorder %s27, %s30
    %p39 = scmp.eq.s32.totalorder %s22, 1
    %p40 = por %p38, %p39
    %p41 = scmp.ne.s32.totalorder %s30, %s31
    %p42 = scmp.eq.s32.totalorder %s22, 0
    %p43 = por %p41, %p42
    %p44 = scmp.ne.s32.totalorder %s30, %s31
    %p45 = scmp.eq.s32.totalorder %s23, 1
    %p46 = por %p44, %p45
    %p48 = scmp.ne.s32.totalorder %s31, %s47
    %p49 = scmp.eq.s32.totalorder %s23, 0
    %p50 = por %p48, %p49
    %s52 = sadd.s32 %s51, 1
    %p55 = scmp.eq.s32.totalorder %s17, 1
    %p56 = scmp.ne.s32.totalorder %s51, %s53
    %p57 = scmp.eq.s32.totalorder %s17, 0
    %p58 = por %p56, %p57
    %p59 = scmp.ne.s32.totalorder %s51, %s53
    %p60 = scmp.eq.s32.totalorder %s22, 1
    %p61 = por %p59, %p60
    %p62 = scmp.ne.s32.totalorder %s53, %s54
    %p63 = scmp.eq.s32.totalorder %s22, 0
    %p64 = por %p62, %p63
    %p65 = scmp.ne.s32.totalorder %s53, %s54
    %p66 = scmp.eq.s32.totalorder %s23, 1
    %p67 = por %p65, %p66
    %p69 = scmp.ne.s32.totalorder %s54, %s68
    %p70 = scmp.eq.s32.totalorder %s23, 0
    %p71 = por %p69, %p70
    %s72 = ssub.s32 %s17, %s24
    %p73 = scmp.eq.s32.totalorder %s72, 0
    %s75 = sadd.s32 %s74, 1
    %s76 = scalar_select %p73, %s74, %s75
    %p79 = pneg %p73
    %p80 = scmp.eq.s32.totalorder %s17, 1
    %p81 = por %p79, %p80
    %p82 = scmp.ne.s32.totalorder %s74, %s77
    %p83 = scmp.eq.s32.totalorder %s17, 0
    %p84 = por %p82, %p83
    %p85 = scmp.ne.s32.totalorder %s74, %s77
    %p86 = scmp.eq.s32.totalorder %s22, 1
    %p87 = por %p85, %p86
    %p88 = scmp.ne.s32.totalorder %s77, %s78
    %p89 = scmp.eq.s32.totalorder %s22, 0
    %p90 = por %p88, %p89
    %p91 = scmp.ne.s32.totalorder %s77, %s78
    %p92 = scmp.eq.s32.totalorder %s23, 1
    %p93 = por %p91, %p92
    %p95 = scmp.ne.s32.totalorder %s78, %s94
    %p96 = scmp.eq.s32.totalorder %s23, 0
    %p97 = por %p95, %p96
    %s99 = sadd.s32 %s98, 1
    %p102 = scmp.eq.s32.totalorder %s17, 1
    %p103 = scmp.ne.s32.totalorder %s98, %s100
    %p104 = scmp.eq.s32.totalorder %s17, 0
    %p105 = por %p103, %p104
    %p106 = scmp.ne.s32.totalorder %s98, %s100
    %p107 = scmp.eq.s32.totalorder %s22, 1
    %p108 = por %p106, %p107
    %p109 = scmp.ne.s32.totalorder %s100, %s101
    %p110 = scmp.eq.s32.totalorder %s22, 0
    %p111 = por %p109, %p110
    %p112 = scmp.ne.s32.totalorder %s100, %s101
    %p113 = scmp.eq.s32.totalorder %s23, 1
    %p114 = por %p112, %p113
    %p116 = scmp.ne.s32.totalorder %s101, %s115
    %p117 = scmp.eq.s32.totalorder %s23, 0
    %p118 = por %p116, %p117
    %s120 = sadd.s32 %s119, 1
    %p123 = scmp.eq.s32.totalorder %s17, 1
    %p124 = scmp.ne.s32.totalorder %s119, %s121
    %p125 = scmp.eq.s32.totalorder %s17, 0
    %p126 = por %p124, %p125
    %p127 = scmp.ne.s32.totalorder %s119, %s121
    %p128 = scmp.eq.s32.totalorder %s22, 1
    %p129 = por %p127, %p128
    %p130 = scmp.ne.s32.totalorder %s121, %s122
    %p131 = scmp.eq.s32.totalorder %s22, 0
    %p132 = por %p130, %p131
    %p133 = scmp.ne.s32.totalorder %s121, %s122
    %p134 = scmp.eq.s32.totalorder %s23, 1
    %p135 = por %p133, %p134
    %p137 = scmp.ne.s32.totalorder %s122, %s136
    %p138 = scmp.eq.s32.totalorder %s23, 0
    %p139 = por %p137, %p138
    %s141 = sadd.s32 %s140, 1
    %p144 = scmp.eq.s32.totalorder %s17, 1
    %p145 = scmp.ne.s32.totalorder %s140, %s142
    %p146 = scmp.eq.s32.totalorder %s17, 0
    %p147 = por %p145, %p146
    %p148 = scmp.ne.s32.totalorder %s140, %s142
    %p149 = scmp.eq.s32.totalorder %s22, 1
    %p150 = por %p148, %p149
    %p151 = scmp.ne.s32.totalorder %s142, %s143
    %p152 = scmp.eq.s32.totalorder %s22, 0
    %p153 = por %p151, %p152
    %p154 = scmp.ne.s32.totalorder %s142, %s143
    %p155 = scmp.eq.s32.totalorder %s23, 1
    %p156 = por %p154, %p155
    %p158 = scmp.ne.s32.totalorder %s143, %s157
    %p159 = scmp.eq.s32.totalorder %s23, 0
    %p160 = por %p158, %p159
    %s162 = sadd.s32 %s161, 1
    %p165 = scmp.eq.s32.totalorder %s17, 1
    %p166 = scmp.ne.s32.totalorder %s161, %s163
    %p167 = scmp.eq.s32.totalorder %s17, 0
    %p168 = por %p166, %p167
    %p169 = scmp.ne.s32.totalorder %s161, %s163
    %p170 = scmp.eq.s32.totalorder %s22, 1
    %p171 = por %p169, %p170
    %p172 = scmp.ne.s32.totalorder %s163, %s164
    %p173 = scmp.eq.s32.totalorder %s22, 0
    %p174 = por %p172, %p173
    %p175 = scmp.ne.s32.totalorder %s163, %s164
    %p176 = scmp.eq.s32.totalorder %s23, 1
    %p177 = por %p175, %p176
    %p179 = scmp.ne.s32.totalorder %s164, %s178
    %p180 = scmp.eq.s32.totalorder %s23, 0
    %p181 = por %p179, %p180
    %s183 = sadd.s32 %s182, 1
    %p186 = scmp.eq.s32.totalorder %s17, 1
    %p187 = scmp.ne.s32.totalorder %s182, %s184
    %p188 = scmp.eq.s32.totalorder %s17, 0
    %p189 = por %p187, %p188
    %p190 = scmp.ne.s32.totalorder %s182, %s184
    %p191 = scmp.eq.s32.totalorder %s22, 1
    %p192 = por %p190, %p191
    %p193 = scmp.ne.s32.totalorder %s184, %s185
    %p194 = scmp.eq.s32.totalorder %s22, 0
    %p195 = por %p193, %p194
    %p196 = scmp.ne.s32.totalorder %s184, %s185
    %p197 = scmp.eq.s32.totalorder %s23, 1
    %p198 = por %p196, %p197
    %p200 = scmp.ne.s32.totalorder %s185, %s199
    %p201 = scmp.eq.s32.totalorder %s23, 0
    %p202 = por %p200, %p201
    %s203 = ssub.s32 %s17, %s24
    %p204 = scmp.eq.s32.totalorder %s203, 0
    %s206 = sadd.s32 %s205, 1
    %s207 = scalar_select %p204, %s205, %s206
    %p210 = pneg %p204
    %p211 = scmp.eq.s32.totalorder %s17, 1
    %p212 = por %p210, %p211
    %p213 = scmp.ne.s32.totalorder %s205, %s208
    %p214 = scmp.eq.s32.totalorder %s17, 0
    %p215 = por %p213, %p214
    %p216 = scmp.ne.s32.totalorder %s205, %s208
    %p217 = scmp.eq.s32.totalorder %s22, 1
    %p218 = por %p216, %p217
    %p219 = scmp.ne.s32.totalorder %s208, %s209
    %p220 = scmp.eq.s32.totalorder %s22, 0
    %p221 = por %p219, %p220
    %p222 = scmp.ne.s32.totalorder %s208, %s209
    %p223 = scmp.eq.s32.totalorder %s23, 1
    %p224 = por %p222, %p223
    %p226 = scmp.ne.s32.totalorder %s209, %s225
    %p227 = scmp.eq.s32.totalorder %s23, 0
    %p228 = por %p226, %p227
    %s229 = ssub.s32 %s17, %s24
    %p230 = scmp.eq.s32.totalorder %s229, 0
    %s232 = sadd.s32 %s231, 1
    %s233 = scalar_select %p230, %s231, %s232
    %p236 = pneg %p230
    %p237 = scmp.eq.s32.totalorder %s17, 1
    %p238 = por %p236, %p237
    %p239 = scmp.ne.s32.totalorder %s231, %s234
    %p240 = scmp.eq.s32.totalorder %s17, 0
    %p241 = por %p239, %p240
    %p242 = scmp.ne.s32.totalorder %s231, %s234
    %p243 = scmp.eq.s32.totalorder %s22, 1
    %p244 = por %p242, %p243
    %p245 = scmp.ne.s32.totalorder %s234, %s235
    %p246 = scmp.eq.s32.totalorder %s22, 0
    %p247 = por %p245, %p246
    %p248 = scmp.ne.s32.totalorder %s234, %s235
    %p249 = scmp.eq.s32.totalorder %s23, 1
    %p250 = por %p248, %p249
    %p252 = scmp.ne.s32.totalorder %s235, %s251
    %p253 = scmp.eq.s32.totalorder %s23, 0
    %p254 = por %p252, %p253
    %s256 = sadd.s32 %s255, 1
    %p259 = scmp.eq.s32.totalorder %s17, 1
    %p260 = scmp.ne.s32.totalorder %s255, %s257
    %p261 = scmp.eq.s32.totalorder %s17, 0
    %p262 = por %p260, %p261
    %p263 = scmp.ne.s32.totalorder %s255, %s257
    %p264 = scmp.eq.s32.totalorder %s22, 1
    %p265 = por %p263, %p264
    %p266 = scmp.ne.s32.totalorder %s257, %s258
    %p267 = scmp.eq.s32.totalorder %s22, 0
    %p268 = por %p266, %p267
    %p269 = scmp.ne.s32.totalorder %s257, %s258
    %p270 = scmp.eq.s32.totalorder %s23, 1
    %p271 = por %p269, %p270
    %p273 = scmp.ne.s32.totalorder %s258, %s272
    %p274 = scmp.eq.s32.totalorder %s23, 0
    %p275 = por %p273, %p274
    %p276 = scmp.le.s32.totalorder 1, %s17
    %p277 = scmp.lt.s32.totalorder %s17, 3
    %p278 = pnand %p276, %p277
    %p279 = pneg %p278
    // Predicated region
    $region9: #{mesh_cls_forward.6} parent=5 // pred_check
      _
    $region10: #{mesh_cls_forward.6} parent=5 // pred_check_branch
      %281 = sbr.rel (%p278) target = $region12
    $region11: #{mesh_cls_forward.6} parent=5 // pred_region
      %s282 = ssub.s32 %s17, 1
      // Predicated region
      $region13: #{mesh_cls_forward.6} parent=11 // pred_check
        %p283 = pneg %p64
      $region14: #{mesh_cls_forward.6} parent=11 // pred_check_branch
        %285 = sbr.rel (%p283) target = $region16
      $region15: #{mesh_cls_forward.6} parent=11 // pred_region
        _
      $region16: #{mesh_cls_forward.6} parent=11 // pred_fallthru
        _
      // Predicated region
      $region17: #{mesh_cls_forward.6} parent=11 // pred_check
        %p286 = pneg %p111
      $region18: #{mesh_cls_forward.6} parent=11 // pred_check_branch
        %288 = sbr.rel (%p286) target = $region20
      $region19: #{mesh_cls_forward.6} parent=11 // pred_region
        _
      $region20: #{mesh_cls_forward.6} parent=11 // pred_fallthru
        _
      // Predicated region
      $region21: #{mesh_cls_forward.6} parent=11 // pred_check
        %p289 = pneg %p132
      $region22: #{mesh_cls_forward.6} parent=11 // pred_check_branch
        %291 = sbr.rel (%p289) target = $region24
      $region23: #{mesh_cls_forward.6} parent=11 // pred_region
        _
      $region24: #{mesh_cls_forward.6} parent=11 // pred_fallthru
        _
      // Predicated region
      $region25: #{mesh_cls_forward.6} parent=11 // pred_check
        %p292 = pneg %p153
      $region26: #{mesh_cls_forward.6} parent=11 // pred_check_branch
        %294 = sbr.rel (%p292) target = $region28
      $region27: #{mesh_cls_forward.6} parent=11 // pred_region
        _
      $region28: #{mesh_cls_forward.6} parent=11 // pred_fallthru
        _
      // Predicated region
      $region29: #{mesh_cls_forward.6} parent=11 // pred_check
        %p295 = pneg %p174
      $region30: #{mesh_cls_forward.6} parent=11 // pred_check_branch
        %297 = sbr.rel (%p295) target = $region32
      $region31: #{mesh_cls_forward.6} parent=11 // pred_region
        _
      $region32: #{mesh_cls_forward.6} parent=11 // pred_fallthru
        _
      // Predicated region
      $region33: #{mesh_cls_forward.6} parent=11 // pred_check
        %p298 = pneg %p195
      $region34: #{mesh_cls_forward.6} parent=11 // pred_check_branch
        %300 = sbr.rel (%p298) target = $region36
      $region35: #{mesh_cls_forward.6} parent=11 // pred_region
        _
      $region36: #{mesh_cls_forward.6} parent=11 // pred_fallthru
        _
    $region12: #{mesh_cls_forward.6} parent=5 // pred_fallthru
      _
    %p301 = scmp.lt.s32.totalorder %s17, 2
    // Predicated region
    $region37: #{mesh_cls_forward.6} parent=5 // pred_check
      %p302 = pneg %p301
    $region38: #{mesh_cls_forward.6} parent=5 // pred_check_branch
      %304 = sbr.rel (%p302) target = $region40
    $region39: #{mesh_cls_forward.6} parent=5 // pred_region
      // Predicated region
      $region41: #{mesh_cls_forward.6} parent=39 // pred_check
        %p305 = pneg %p37
      $region42: #{mesh_cls_forward.6} parent=39 // pred_check_branch
        %307 = sbr.rel (%p305) target = $region44
      $region43: #{mesh_cls_forward.6} parent=39 // pred_region
        %s308 = smul.u32 8, %s17
        %p309 = scmp.lt.s32.totalorder %s308, 15
        %s310 = scalar_select %p309, %s308, 15
        %s311 = smul.addr %s310, 4
        %s312 = scalar_lea.vmem %s0, %s311
        %s313 = smul.u32 8, %s17
      $region44: #{mesh_cls_forward.6} parent=39 // pred_fallthru
        _
      // Predicated region
      $region45: #{mesh_cls_forward.6} parent=39 // pred_check
        %p314 = pneg %p84
      $region46: #{mesh_cls_forward.6} parent=39 // pred_check_branch
        %316 = sbr.rel (%p314) target = $region48
      $region47: #{mesh_cls_forward.6} parent=39 // pred_region
        %s317 = smul.u32 8, %s17
        %p318 = scmp.lt.s32.totalorder %s317, 15
        %s319 = scalar_select %p318, %s317, 15
        %s320 = smul.addr %s319, 8
        %s321 = scalar_lea.vmem %s2, %s320
        %s322 = smul.u32 8, %s17
      $region48: #{mesh_cls_forward.6} parent=39 // pred_fallthru
        _
    $region40: #{mesh_cls_forward.6} parent=5 // pred_fallthru
      _
    %p323 = scmp.le.s32.totalorder 1, %s17
    %p324 = scmp.lt.s32.totalorder %s17, 3
    %p325 = pnand %p323, %p324
    %p326 = pneg %p325
    // Predicated region
    $region49: #{mesh_cls_forward.6} parent=5 // pred_check
      _
    $region50: #{mesh_cls_forward.6} parent=5 // pred_check_branch
      %328 = sbr.rel (%p325) target = $region52
    $region51: #{mesh_cls_forward.6} parent=5 // pred_region
      %s329 = ssub.s32 %s17, 1
      %s330 = smul.u32 8, %s22
      %p331 = scmp.lt.s32.totalorder %s330, 15
      %s332 = scalar_select %p331, %s330, 15
      %s333 = smul.addr %s332, 4
      %s334 = scalar_lea.vmem %s0, %s333
      %p335 = pneg %p43
      %p336 = pneg %p40
      %p337 = pneg %p64
      %p338 = pneg %p61
      %s339 = smul.u32 8, %s22
      %p340 = scmp.lt.s32.totalorder %s339, 15
      %s341 = scalar_select %p340, %s339, 15
      %s342 = smul.addr %s341, 8
      %s343 = scalar_lea.vmem %s2, %s342
      %p344 = pneg %p90
      %p345 = pneg %p87
      %p346 = pneg %p111
      %p347 = pneg %p108
      %p348 = pneg %p132
      %p349 = pneg %p129
      %p350 = pneg %p153
      %p351 = pneg %p150
      %p352 = pneg %p174
      %p353 = pneg %p171
      %p354 = pneg %p195
      %p355 = pneg %p192
      %p356 = pneg %p221
      %p357 = pneg %p218
      %s358 = smul.u32 8, %s22
      %p359 = scmp.lt.s32.totalorder %s358, 15
      %s360 = scalar_select %p359, %s358, 15
      %s361 = smul.addr %s360, 8
      %s362 = scalar_lea.vmem %s8, %s361
      %p363 = pneg %p247
      %p364 = pneg %p244
      %s365 = smul.u32 8, %s22
      %p366 = scmp.lt.s32.totalorder %s365, 15
      %s367 = scalar_select %p366, %s365, 15
      %s368 = smul.addr %s367, 8
      %s369 = scalar_lea.vmem %s9, %s368
      %p370 = pneg %p268
      %p371 = pneg %p265
      %s372 = smul.u32 8, %s22
      %p373 = scmp.lt.s32.totalorder %s372, 15
      %s374 = scalar_select %p373, %s372, 15
      %s375 = smul.addr %s374, 4
      %s376 = scalar_lea.vmem %s0, %s375
      %s377 = smul.u32 8, %s22
      %s378 = smul.u32 8, %s22
      %p379 = scmp.lt.s32.totalorder %s378, 15
      %s380 = scalar_select %p379, %s378, 15
      %s381 = smul.addr %s380, 8
      %s382 = scalar_lea.vmem %s2, %s381
      %s383 = smul.u32 8, %s22
      %s384 = smul.u32 8, %s22
      %p385 = scmp.lt.s32.totalorder %s384, 15
      %s386 = scalar_select %p385, %s384, 15
      %s387 = smul.addr %s386, 8
      %s388 = scalar_lea.vmem %s8, %s387
      %s389 = smul.u32 8, %s22
      %s390 = smul.u32 8, %s22
      %p391 = scmp.lt.s32.totalorder %s390, 15
      %s392 = scalar_select %p391, %s390, 15
      %s393 = smul.addr %s392, 8
      %s394 = scalar_lea.vmem %s9, %s393
      %s395 = smul.u32 8, %s22
      %p397 = scmp.eq.s32.totalorder %s22, 0
      // Predicated region
      $region53: #{mesh_cls_forward.6} parent=51 // pred_check
        %p398 = pneg %p397
      $region54: #{mesh_cls_forward.6} parent=51 // pred_check_branch
        %400 = sbr.rel (%p398) target = $region56
      $region55: #{mesh_cls_forward.6} parent=51 // pred_region
        %401 = vst [vmem:[%s10] sm:$0x1] 0.0
      $region56: #{mesh_cls_forward.6} parent=51 // pred_fallthru
        _
      %v402 = vld [vmem:[%s376] sm:$0xf]
      %v403 = vld [vmem:[%s376 + $0x4] sm:$0xf]
      %v404 = vld [vmem:[%s376 + $0x8] sm:$0xf]
      %v405 = vld [vmem:[%s376 + $0xc] sm:$0xf]
      %v406 = vld [vmem:[%s376 + $0x10] sm:$0xf]
      %v407 = vld [vmem:[%s376 + $0x14] sm:$0xf]
      %v408 = vld [vmem:[%s376 + $0x18] sm:$0xf]
      %v409 = vld [vmem:[%s376 + $0x1c] sm:$0xf]
      %v410 = vld [vmem:[%s1] sm:$0xf]
      %v411 = vld [vmem:[%s1 + $0x4] sm:$0xf]
      %v412 = vld [vmem:[%s1 + $0x8] sm:$0xf]
      %v413 = vld [vmem:[%s1 + $0xc] sm:$0xf]
      %v414 = vld [vmem:[%s1 + $0x10] sm:$0xf]
      %v415 = vld [vmem:[%s1 + $0x14] sm:$0xf]
      %v416 = vld [vmem:[%s1 + $0x18] sm:$0xf]
      %v417 = vld [vmem:[%s1 + $0x1c] sm:$0xf]
      %v418 = vld [vmem:[%s1 + $0x20] sm:$0xf]
      %v419 = vld [vmem:[%s1 + $0x24] sm:$0xf]
      %v420 = vld [vmem:[%s1 + $0x28] sm:$0xf]
      %v421 = vld [vmem:[%s1 + $0x2c] sm:$0xf]
      %v422 = vld [vmem:[%s1 + $0x30] sm:$0xf]
      %v423 = vld [vmem:[%s1 + $0x34] sm:$0xf]
      %v424 = vld [vmem:[%s1 + $0x38] sm:$0xf]
      %v425 = vld [vmem:[%s1 + $0x3c] sm:$0xf]
      %v426 = vld [vmem:[%s382] sm:$0xff]
      %v427 = vld [vmem:[%s382 + $0x8] sm:$0xff]
      %v428 = vld [vmem:[%s382 + $0x10] sm:$0xff]
      %v429 = vld [vmem:[%s382 + $0x18] sm:$0xff]
      %v430 = vld [vmem:[%s382 + $0x20] sm:$0xff]
      %v431 = vld [vmem:[%s382 + $0x28] sm:$0xff]
      %v432 = vld [vmem:[%s382 + $0x30] sm:$0xff]
      %v433 = vld [vmem:[%s382 + $0x38] sm:$0xff]
      %s434 = smul.u32 %s22, 64
      %s435 = sshra.s32 %s434, 3
      %s436 = sand.u32 %s434, 7
      %s437 = smul.addr %s435, 4
      %s438 = scalar_lea.vmem %s1, %s437
      %v439 = vld [vmem:[%s438] sm:$0xf]
      %v440 = vld [vmem:[%s438 + $0x4] sm:$0xf]
      %v441 = vld [vmem:[%s438 + $0x8] sm:$0xf]
      %v442 = vld [vmem:[%s438 + $0xc] sm:$0xf]
      %v443 = vld [vmem:[%s438 + $0x10] sm:$0xf]
      %v444 = vld [vmem:[%s438 + $0x14] sm:$0xf]
      %v445 = vld [vmem:[%s438 + $0x18] sm:$0xf]
      %v446 = vld [vmem:[%s438 + $0x1c] sm:$0xf]
      %v447 = vunpack.c.l.bf16 %v439
      %v448 = vunpack.c.l.bf16 %v440
      %v449 = vunpack.c.l.bf16 %v441
      %v450 = vunpack.c.l.bf16 %v442
      %v451 = vunpack.c.l.bf16 %v443
      %v452 = vunpack.c.l.bf16 %v444
      %v453 = vunpack.c.l.bf16 %v445
      %v454 = vunpack.c.l.bf16 %v446
      %v463 = vunpack.c.l.b16 %v402
      %v464 = vunpack.c.l.b16 %v403
      %v465 = vunpack.c.l.b16 %v404
      %v466 = vunpack.c.l.b16 %v405
      %v467 = vunpack.c.l.b16 %v406
      %v468 = vunpack.c.l.b16 %v407
      %v469 = vunpack.c.l.b16 %v408
      %v470 = vunpack.c.l.b16 %v409
      %v471 = vpack.c.b16 %v464, %v463
      %v472 = vpack.c.b16 %v466, %v465
      %v473 = vpack.c.b16 %v468, %v467
      %v474 = vpack.c.b16 %v470, %v469
      %v495 = vunpack.c.l.b16 %v410
      %v496 = vunpack.c.l.b16 %v411
      %v497 = vunpack.c.l.b16 %v412
      %v498 = vunpack.c.l.b16 %v413
      %v499 = vunpack.c.l.b16 %v414
      %v500 = vunpack.c.l.b16 %v415
      %v501 = vunpack.c.l.b16 %v416
      %v502 = vunpack.c.l.b16 %v417
      %v503 = vunpack.c.l.b16 %v418
      %v504 = vunpack.c.l.b16 %v419
      %v505 = vunpack.c.l.b16 %v420
      %v506 = vunpack.c.l.b16 %v421
      %v507 = vunpack.c.l.b16 %v422
      %v508 = vunpack.c.l.b16 %v423
      %v509 = vunpack.c.l.b16 %v424
      %v510 = vunpack.c.l.b16 %v425
      %v511 = vpack.c.b16 %v496, %v495
      %v512 = vpack.c.b16 %v498, %v497
      %v513 = vpack.c.b16 %v500, %v499
      %v514 = vpack.c.b16 %v502, %v501
      %v515 = vpack.c.b16 %v504, %v503
      %v516 = vpack.c.b16 %v506, %v505
      %v517 = vpack.c.b16 %v508, %v507
      %v518 = vpack.c.b16 %v510, %v509
      %527 = vmatprep.subr.bf16.mxu0 0
      %528 = vmatpush1.bf16.msra.mxu0 %v511
      %529 = vmatprep.subr.bf16.mxu0 0
      %530 = vmatpush1.bf16.msra.mxu0 %v512
      %531 = vmatprep.subr.bf16.mxu0 0
      %532 = vmatpush1.bf16.msra.mxu0 %v513
      %533 = vmatprep.subr.bf16.mxu0 0
      %534 = vmatpush1.bf16.msra.mxu0 %v514
      %535 = vmatprep.subr.bf16.mxu0 0
      %536 = vmatpush1.bf16.msra.mxu0 %v515
      %537 = vmatprep.subr.bf16.mxu0 0
      %538 = vmatpush1.bf16.msra.mxu0 %v516
      %539 = vmatprep.subr.bf16.mxu0 0
      %540 = vmatpush1.bf16.msra.mxu0 %v517
      %541 = vmatprep.subr.bf16.mxu0 0
      %542 = vmatpush1.bf16.msra.mxu0 %v518
      %543 = vmatprep.subr.bf16.mxu0 0
      %544 = vmatpush1.bf16.msra.mxu0 0
      %545 = vmatprep.subr.bf16.mxu0 0
      %546 = vmatpush1.bf16.msra.mxu0 0
      %547 = vmatprep.subr.bf16.mxu0 0
      %548 = vmatpush1.bf16.msra.mxu0 0
      %549 = vmatprep.subr.bf16.mxu0 0
      %550 = vmatpush1.bf16.msra.mxu0 0
      %551 = vmatprep.subr.bf16.mxu0 0
      %552 = vmatpush1.bf16.msra.mxu0 0
      %553 = vmatprep.subr.bf16.mxu0 0
      %554 = vmatpush1.bf16.msra.mxu0 0
      %555 = vmatprep.subr.bf16.mxu0 0
      %556 = vmatpush1.bf16.msra.mxu0 0
      %557 = vmatprep.subr.bf16.mxu0 0
      %558 = vmatpush1.bf16.msra.mxu0 0
      %559 = vmatprep.mubr.bf16.mxu0 0
      %560 = vmatmul.mubr.bf16.gmra.mrb[0].mxu0 %v471
      %v561 = vpop.f32.mrb[0].mxu0
      %v562 = vadd.f32 %v447, %v561
      %v563 = vpop.f32.mrb[0].mxu0
      %v564 = vpop.f32.mrb[0].mxu0
      %v565 = vadd.f32 %v448, %v564
      %v566 = vpop.f32.mrb[0].mxu0
      %567 = vmatprep.mubr.bf16.mxu0 0
      %568 = vmatmul.mubr.bf16.gmra.mrb[0].mxu0 %v472
      %v569 = vpop.f32.mrb[0].mxu0
      %v570 = vadd.f32 %v449, %v569
      %v571 = vpop.f32.mrb[0].mxu0
      %v572 = vpop.f32.mrb[0].mxu0
      %v573 = vadd.f32 %v450, %v572
      %v574 = vpop.f32.mrb[0].mxu0
      %575 = vmatprep.mubr.bf16.mxu0 0
      %576 = vmatmul.mubr.bf16.gmra.mrb[0].mxu0 %v473
      %v577 = vpop.f32.mrb[0].mxu0
      %v578 = vadd.f32 %v451, %v577
      %v579 = vpop.f32.mrb[0].mxu0
      %v580 = vpop.f32.mrb[0].mxu0
      %v581 = vadd.f32 %v452, %v580
      %v582 = vpop.f32.mrb[0].mxu0
      %583 = vmatprep.mubr.bf16.mxu0 0
      %584 = vmatmul.mubr.bf16.gmra.mrb[0].mxu0 %v474
      %v585 = vpop.f32.mrb[0].mxu0
      %v586 = vadd.f32 %v453, %v585
      %v587 = vpop.f32.mrb[0].mxu0
      %v588 = vpop.f32.mrb[0].mxu0
      %v589 = vadd.f32 %v454, %v588
      %v590 = vpop.f32.mrb[0].mxu0
      %591 = vdwg.mxu0
      %593 = vset.pattern.permute.xlu0 2
      %594 = vperm.xlu0 %593, %v426
      %v595 = vpop.permute.xlu0 %594
      %598 = vset.pattern.permute.xlu0 2
      %599 = vperm.xlu0 %598, %v427
      %v600 = vpop.permute.xlu0 %599
      %603 = vset.pattern.permute.xlu0 2
      %604 = vperm.xlu0 %603, %v428
      %v605 = vpop.permute.xlu0 %604
      %608 = vset.pattern.permute.xlu0 2
      %609 = vperm.xlu0 %608, %v429
      %v610 = vpop.permute.xlu0 %609
      %613 = vset.pattern.permute.xlu0 2
      %614 = vperm.xlu0 %613, %v430
      %v615 = vpop.permute.xlu0 %614
      %618 = vset.pattern.permute.xlu0 2
      %619 = vperm.xlu0 %618, %v431
      %v620 = vpop.permute.xlu0 %619
      %623 = vset.pattern.permute.xlu0 2
      %624 = vperm.xlu0 %623, %v432
      %v625 = vpop.permute.xlu0 %624
      %628 = vset.pattern.permute.xlu0 2
      %629 = vperm.xlu0 %628, %v433
      %v630 = vpop.permute.xlu0 %629
      %v632 = vmul.f32 %v595, %v562
      %v633 = vmul.f32 %v600, %v565
      %v634 = vmul.f32 %v605, %v570
      %v635 = vmul.f32 %v610, %v573
      %v636 = vmul.f32 %v615, %v578
      %v637 = vmul.f32 %v620, %v581
      %v638 = vmul.f32 %v625, %v586
      %v639 = vmul.f32 %v630, %v589
      %v640 = vld [vmem:[%s3] sm:$0x1]
      %v642 = vlaneseq
      %v643 = vshrl.u32 %v642, 7
      %v644 = vsub.s32 0, %v643
      %v645 = vrot.slane %v640, %v644
      %v647 = vadd.f32 %v632, %v645
      %v648 = vadd.f32 %v633, %v645
      %v649 = vadd.f32 %v634, %v645
      %v650 = vadd.f32 %v635, %v645
      %v651 = vadd.f32 %v636, %v645
      %v652 = vadd.f32 %v637, %v645
      %v653 = vadd.f32 %v638, %v645
      %v654 = vadd.f32 %v639, %v645
      %v655 = vld [vmem:[%s4] sm:$0x1]
      %v657 = vlaneseq
      %v658 = vshrl.u32 %v657, 7
      %v659 = vsub.s32 0, %v658
      %v660 = vrot.slane %v655, %v659
      %v662 = vmul.f32 %v647, %v660
      %v663 = vmul.f32 %v648, %v660
      %v664 = vmul.f32 %v649, %v660
      %v665 = vmul.f32 %v650, %v660
      %v666 = vmul.f32 %v651, %v660
      %v667 = vmul.f32 %v652, %v660
      %v668 = vmul.f32 %v653, %v660
      %v669 = vmul.f32 %v654, %v660
      %v670 = vld [vmem:[%s5] sm:$0x1]
      %v672 = vlaneseq
      %v673 = vshrl.u32 %v672, 7
      %v674 = vsub.s32 0, %v673
      %v675 = vrot.slane %v670, %v674
      %v677 = vadd.f32 %v662, %v675
      %v678 = vadd.f32 %v663, %v675
      %v679 = vadd.f32 %v664, %v675
      %v680 = vadd.f32 %v665, %v675
      %v681 = vadd.f32 %v666, %v675
      %v682 = vadd.f32 %v667, %v675
      %v683 = vadd.f32 %v668, %v675
      %v684 = vadd.f32 %v669, %v675
      %v685 = vmax.f32 %v677, 0.0
      %v686 = vmax.f32 %v678, 0.0
      %v687 = vmax.f32 %v679, 0.0
      %v688 = vmax.f32 %v680, 0.0
      %v689 = vmax.f32 %v681, 0.0
      %v690 = vmax.f32 %v682, 0.0
      %v691 = vmax.f32 %v683, 0.0
      %v692 = vmax.f32 %v684, 0.0
      %693 = vset.pattern.permute.xlu0 1
      %694 = vperm.xlu0 %693, %v426
      %v695 = vpop.permute.xlu0 %694
      %697 = vset.pattern.permute.xlu0 1
      %698 = vperm.xlu0 %697, %v427
      %v699 = vpop.permute.xlu0 %698
      %701 = vset.pattern.permute.xlu0 1
      %702 = vperm.xlu0 %701, %v428
      %v703 = vpop.permute.xlu0 %702
      %705 = vset.pattern.permute.xlu0 1
      %706 = vperm.xlu0 %705, %v429
      %v707 = vpop.permute.xlu0 %706
      %709 = vset.pattern.permute.xlu0 1
      %710 = vperm.xlu0 %709, %v430
      %v711 = vpop.permute.xlu0 %710
      %713 = vset.pattern.permute.xlu0 1
      %714 = vperm.xlu0 %713, %v431
      %v715 = vpop.permute.xlu0 %714
      %717 = vset.pattern.permute.xlu0 1
      %718 = vperm.xlu0 %717, %v432
      %v719 = vpop.permute.xlu0 %718
      %721 = vset.pattern.permute.xlu0 1
      %722 = vperm.xlu0 %721, %v433
      %v723 = vpop.permute.xlu0 %722
      %v725 = vmul.f32 %v685, %v695
      %v726 = vmul.f32 %v686, %v699
      %v727 = vmul.f32 %v687, %v703
      %v728 = vmul.f32 %v688, %v707
      %v729 = vmul.f32 %v689, %v711
      %v730 = vmul.f32 %v690, %v715
      %v731 = vmul.f32 %v691, %v719
      %v732 = vmul.f32 %v692, %v723
      %733 = vst [vmem:[%s388] sm:$0xff] %v725
      %734 = vst [vmem:[%s388 + $0x8] sm:$0xff] %v726
      %735 = vst [vmem:[%s388 + $0x10] sm:$0xff] %v727
      %736 = vst [vmem:[%s388 + $0x18] sm:$0xff] %v728
      %737 = vst [vmem:[%s388 + $0x20] sm:$0xff] %v729
      %738 = vst [vmem:[%s388 + $0x28] sm:$0xff] %v730
      %739 = vst [vmem:[%s388 + $0x30] sm:$0xff] %v731
      %740 = vst [vmem:[%s388 + $0x38] sm:$0xff] %v732
      %v741 = vld [vmem:[%s6] sm:$0x1]
      %v743 = vlaneseq
      %v744 = vshrl.u32 %v743, 7
      %v745 = vsub.s32 0, %v744
      %v746 = vrot.slane %v741, %v745
      %v748 = vmul.f32 %v725, %v746
      %v749 = vmul.f32 %v726, %v746
      %v750 = vmul.f32 %v727, %v746
      %v751 = vmul.f32 %v728, %v746
      %v752 = vmul.f32 %v729, %v746
      %v753 = vmul.f32 %v730, %v746
      %v754 = vmul.f32 %v731, %v746
      %v755 = vmul.f32 %v732, %v746
      %756 = vadd.xlane.f32.xlu0 %v748
      %v757 = vpop.xlane.xlu0 %756
      %758 = vadd.xlane.f32.xlu0 %v749
      %v759 = vpop.xlane.xlu0 %758
      %760 = vadd.xlane.f32.xlu0 %v750
      %v761 = vpop.xlane.xlu0 %760
      %762 = vadd.xlane.f32.xlu0 %v751
      %v763 = vpop.xlane.xlu0 %762
      %764 = vadd.xlane.f32.xlu0 %v752
      %v765 = vpop.xlane.xlu0 %764
      %766 = vadd.xlane.f32.xlu0 %v753
      %v767 = vpop.xlane.xlu0 %766
      %768 = vadd.xlane.f32.xlu0 %v754
      %v769 = vpop.xlane.xlu0 %768
      %770 = vadd.xlane.f32.xlu0 %v755
      %v771 = vpop.xlane.xlu0 %770
      %v772 = vld [vmem:[%s7] sm:$0x1]
      %v774 = vlaneseq
      %v775 = vshrl.u32 %v774, 7
      %v776 = vsub.s32 0, %v775
      %v777 = vrot.slane %v772, %v776
      %v779 = vmul.f32 %v725, %v777
      %v780 = vmul.f32 %v726, %v777
      %v781 = vmul.f32 %v727, %v777
      %v782 = vmul.f32 %v728, %v777
      %v783 = vmul.f32 %v729, %v777
      %v784 = vmul.f32 %v730, %v777
      %v785 = vmul.f32 %v731, %v777
      %v786 = vmul.f32 %v732, %v777
      %787 = vadd.xlane.f32.xlu0 %v779
      %v788 = vpop.xlane.xlu0 %787
      %789 = vadd.xlane.f32.xlu0 %v780
      %v790 = vpop.xlane.xlu0 %789
      %791 = vadd.xlane.f32.xlu0 %v781
      %v792 = vpop.xlane.xlu0 %791
      %793 = vadd.xlane.f32.xlu0 %v782
      %v794 = vpop.xlane.xlu0 %793
      %795 = vadd.xlane.f32.xlu0 %v783
      %v796 = vpop.xlane.xlu0 %795
      %797 = vadd.xlane.f32.xlu0 %v784
      %v798 = vpop.xlane.xlu0 %797
      %799 = vadd.xlane.f32.xlu0 %v785
      %v800 = vpop.xlane.xlu0 %799
      %801 = vadd.xlane.f32.xlu0 %v786
      %v802 = vpop.xlane.xlu0 %801
      %vm803 = vcmask 7168
      %804 = vst.msk [vmem:[%s394] sm:$0xff] %vm803, %v788
      %805 = vst.msk [vmem:[%s394 + $0x8] sm:$0xff] %vm803, %v790
      %806 = vst.msk [vmem:[%s394 + $0x10] sm:$0xff] %vm803, %v792
      %807 = vst.msk [vmem:[%s394 + $0x18] sm:$0xff] %vm803, %v794
      %808 = vst.msk [vmem:[%s394 + $0x20] sm:$0xff] %vm803, %v796
      %809 = vst.msk [vmem:[%s394 + $0x28] sm:$0xff] %vm803, %v798
      %810 = vst.msk [vmem:[%s394 + $0x30] sm:$0xff] %vm803, %v800
      %811 = vst.msk [vmem:[%s394 + $0x38] sm:$0xff] %vm803, %v802
      %812 = vxpose.xlu0.b32.start [1/16] %v757, 128
      %813 = vxpose.xlu0.b32.cont [2/16] %v759, 128
      %814 = vxpose.xlu0.b32.cont [3/16] %v761, 128
      %815 = vxpose.xlu0.b32.cont [4/16] %v763, 128
      %816 = vxpose.xlu0.b32.cont [5/16] %v765, 128
      %817 = vxpose.xlu0.b32.cont [6/16] %v767, 128
      %818 = vxpose.xlu0.b32.cont [7/16] %v769, 128
      %819 = vxpose.xlu0.b32.cont [8/16] %v771, 128
      %820 = vxpose.xlu0.b32.cont [9/16] 0.0, 128
      %821 = vxpose.xlu0.b32.cont [10/16] 0.0, 128
      %822 = vxpose.xlu0.b32.cont [11/16] 0.0, 128
      %823 = vxpose.xlu0.b32.cont [12/16] 0.0, 128
      %824 = vxpose.xlu0.b32.cont [13/16] 0.0, 128
      %825 = vxpose.xlu0.b32.cont [14/16] 0.0, 128
      %826 = vxpose.xlu0.b32.cont [15/16] 0.0, 128
      %827 = vxpose.xlu0.b32.end [16/16] 0.0, 128
      %v828 = vpop.trf.xlu0
      %v829 = vpop.trf.xlu0
      %v830 = vpop.trf.xlu0
      %v831 = vpop.trf.xlu0
      %v832 = vpop.trf.xlu0
      %v833 = vpop.trf.xlu0
      %v834 = vpop.trf.xlu0
      %v835 = vpop.trf.xlu0
      %v836 = vpop.trf.xlu0
      %v837 = vpop.trf.xlu0
      %v838 = vpop.trf.xlu0
      %v839 = vpop.trf.xlu0
      %v840 = vpop.trf.xlu0
      %v841 = vpop.trf.xlu0
      %v842 = vpop.trf.xlu0
      %v843 = vpop.trf.xlu0
      %v844 = vpack.c.bf16 %v828, %v828
      %v845 = vld [vmem:[%s10] sm:$0x1]
      %vm846 = vcmask 523264
      %v848 = vsel %vm846, %v844, 0
      %850 = vmatprep.subr.bf16.mxu0 0
      %851 = vmatpush1.bf16.msra.mxu0 %v471
      %852 = vmatprep.subr.bf16.mxu0 0
      %853 = vmatpush1.bf16.msra.mxu0 %v472
      %854 = vmatprep.subr.bf16.mxu0 0
      %855 = vmatpush1.bf16.msra.mxu0 %v473
      %856 = vmatprep.subr.bf16.mxu0 0
      %857 = vmatpush1.bf16.msra.mxu0 %v474
      %858 = vmatprep.subr.bf16.mxu0 0
      %859 = vmatpush1.bf16.msra.mxu0 0
      %860 = vmatprep.subr.bf16.mxu0 0
      %861 = vmatpush1.bf16.msra.mxu0 0
      %862 = vmatprep.subr.bf16.mxu0 0
      %863 = vmatpush1.bf16.msra.mxu0 0
      %864 = vmatprep.subr.bf16.mxu0 0
      %865 = vmatpush1.bf16.msra.mxu0 0
      %866 = vmatprep.subr.bf16.mxu0 0
      %867 = vmatpush1.bf16.msra.mxu0 0
      %868 = vmatprep.subr.bf16.mxu0 0
      %869 = vmatpush1.bf16.msra.mxu0 0
      %870 = vmatprep.subr.bf16.mxu0 0
      %871 = vmatpush1.bf16.msra.mxu0 0
      %872 = vmatprep.subr.bf16.mxu0 0
      %873 = vmatpush1.bf16.msra.mxu0 0
      %874 = vmatprep.subr.bf16.mxu0 0
      %875 = vmatpush1.bf16.msra.mxu0 0
      %876 = vmatprep.subr.bf16.mxu0 0
      %877 = vmatpush1.bf16.msra.mxu0 0
      %878 = vmatprep.subr.bf16.mxu0 0
      %879 = vmatpush1.bf16.msra.mxu0 0
      %880 = vmatprep.subr.bf16.mxu0 0
      %881 = vmatpush1.bf16.msra.mxu0 0
      %882 = vmatprep.mubr.bf16.mxu0 0
      %883 = vmatmul.mubr.bf16.gmra.mrb[0].mxu0 %v848
      %v884 = vpop.f32.mrb[0].mxu0
      %v885 = vadd.f32 0.0, %v884
      %v886 = vpop.f32.mrb[0].mxu0
      %v887 = vpop.f32.mrb[0].mxu0
      %v888 = vpop.f32.mrb[0].mxu0
      %889 = vdwg.mxu0
      %v890 = vadd.f32 %v845, %v885
      %891 = vst [vmem:[%s10] sm:$0x1] %v890
      %s892 = smul.u32 8, %s22
      %p893 = scmp.lt.s32.totalorder %s892, 15
      %s894 = scalar_select %p893, %s892, 15
      %s895 = smul.addr %s894, 8
      %s896 = scalar_lea.vmem %s8, %s895
      %s897 = smul.u32 8, %s22
      %p898 = scmp.lt.s32.totalorder %s897, 15
      %s899 = scalar_select %p898, %s897, 15
      %s900 = smul.addr %s899, 8
      %s901 = scalar_lea.vmem %s9, %s900
      // Predicated region
      $region57: #{mesh_cls_forward.6} parent=51 // pred_check
        %p902 = pneg %p218
      $region58: #{mesh_cls_forward.6} parent=51 // pred_check_branch
        %904 = sbr.rel (%p902) target = $region60
      $region59: #{mesh_cls_forward.6} parent=51 // pred_region
        %s905 = smul.u32 8, %s22
      $region60: #{mesh_cls_forward.6} parent=51 // pred_fallthru
        _
      // Predicated region
      $region61: #{mesh_cls_forward.6} parent=51 // pred_check
        %p906 = pneg %p244
      $region62: #{mesh_cls_forward.6} parent=51 // pred_check_branch
        %908 = sbr.rel (%p906) target = $region64
      $region63: #{mesh_cls_forward.6} parent=51 // pred_region
        %s909 = smul.u32 8, %s22
      $region64: #{mesh_cls_forward.6} parent=51 // pred_fallthru
        _
      // Predicated region
      $region65: #{mesh_cls_forward.6} parent=51 // pred_check
        %p910 = pneg %p265
      $region66: #{mesh_cls_forward.6} parent=51 // pred_check_branch
        %912 = sbr.rel (%p910) target = $region68
      $region67: #{mesh_cls_forward.6} parent=51 // pred_region
        _
      $region68: #{mesh_cls_forward.6} parent=51 // pred_fallthru
        _
      // Predicated region
      $region69: #{mesh_cls_forward.6} parent=51 // pred_check
        %p913 = pneg %p265
      $region70: #{mesh_cls_forward.6} parent=51 // pred_check_branch
        %915 = sbr.rel (%p913) target = $region72
      $region71: #{mesh_cls_forward.6} parent=51 // pred_region
        _
      $region72: #{mesh_cls_forward.6} parent=51 // pred_fallthru
        _
    $region52: #{mesh_cls_forward.6} parent=5 // pred_fallthru
      _
    %p916 = scmp.le.s32.totalorder 2, %s17
    // Predicated region
    $region73: #{mesh_cls_forward.6} parent=5 // pred_check
      %p917 = pneg %p916
    $region74: #{mesh_cls_forward.6} parent=5 // pred_check_branch
      %919 = sbr.rel (%p917) target = $region76
    $region75: #{mesh_cls_forward.6} parent=5 // pred_region
      %s920 = ssub.s32 %s17, 2
      // Predicated region
      $region77: #{mesh_cls_forward.6} parent=75 // pred_check
        %p921 = pneg %p224
      $region78: #{mesh_cls_forward.6} parent=75 // pred_check_branch
        %923 = sbr.rel (%p921) target = $region80
      $region79: #{mesh_cls_forward.6} parent=75 // pred_region
        %s924 = smul.u32 8, %s23
        %p925 = scmp.lt.s32.totalorder %s924, 15
        %s926 = scalar_select %p925, %s924, 15
        %s927 = smul.addr %s926, 8
        %s928 = scalar_lea.vmem %s8, %s927
      $region80: #{mesh_cls_forward.6} parent=75 // pred_fallthru
        _
      // Predicated region
      $region81: #{mesh_cls_forward.6} parent=75 // pred_check
        %p929 = pneg %p250
      $region82: #{mesh_cls_forward.6} parent=75 // pred_check_branch
        %931 = sbr.rel (%p929) target = $region84
      $region83: #{mesh_cls_forward.6} parent=75 // pred_region
        %s932 = smul.u32 8, %s23
        %p933 = scmp.lt.s32.totalorder %s932, 15
        %s934 = scalar_select %p933, %s932, 15
        %s935 = smul.addr %s934, 8
        %s936 = scalar_lea.vmem %s9, %s935
      $region84: #{mesh_cls_forward.6} parent=75 // pred_fallthru
        _
    $region76: #{mesh_cls_forward.6} parent=5 // pred_fallthru
      _
  $region6: #{mesh_cls_forward.6} parent=0 // loop_footer
    %s21 = sadd.s32 1, %s17
  $region7: #{mesh_cls_forward.6} parent=0 // loop_footer_branch
    %16 = sbr.rel target = $region3
  $region8: #{mesh_cls_forward.6} parent=0 // loop_exit
    _

// kernel: mesh_cls_forward.9
$region0: #{mesh_cls_forward.9}
  #allocation0 [shape = 'u32[]', space=smem, size = 0x4, offset = 0x4, fixed_abs, tag = 'smem constant byte address 0x4 - core index']
  #allocation1 [shape = 'u32[144,128]{1,0:T(1,128)}', space=vmem, size = 0x12000, scoped, tag = 'internal scratch']
  %s0 = inlined_call_operand.vmem [shape: f32[2,128], index: 0, kind: input, shape index: {}]
  %s1 = inlined_call_operand.vmem [shape: f32[128,128], index: 1, kind: input, shape index: {}]
  %s2 = inlined_call_operand.vmem [shape: f32[128,32], index: 2, kind: input, shape index: {}]
  %s3 = inlined_call_operand.vmem [shape: f32[1,32], index: 3, kind: input, shape index: {}]
  %s4 = inlined_call_operand.vmem [shape: f32[32,10], index: 4, kind: input, shape index: {}]
  %s5 = inlined_call_operand.vmem [shape: f32[1,10], index: 5, kind: input, shape index: {}]
  %s6 = inlined_call_operand.hbm [shape: f32[2,128], index: 6, kind: output, shape index: {0}]
  %s7 = inlined_call_operand.hbm [shape: f32[2,32], index: 7, kind: output, shape index: {1}]
  %s8 = inlined_call_operand.vmem [shape: f32[2,10], index: 8, kind: output, shape index: {2}]
  %9 = xla_tuple %s6, %s7, %s8
  %s10 = sld [smem:[#allocation0]]
  $region50: #{mesh_cls_forward.9} parent=0
    _
  %s12 = ssub.s32 1, %s10
  %s13 = scalar_select 0, %s12, %s10
  $region1: #{mesh_cls_forward.9} parent=0
    #allocation2 [shape = 'u8[1024]{0}', space=vmem, size = 0x400, scoped, tag = 'output window, operand 0, single buffered']
    #allocation3 [shape = 's32[1]{0}', space=sflag, size = 0x4, scoped, tag = 'scoped memory for mesh_cls_forward.9']
    #allocation4 [shape = 'u8[1024]{0}', space=vmem, size = 0x400, scoped, tag = 'output window, operand 1, single buffered']
    #allocation5 [shape = 's32[1]{0}', space=sflag, size = 0x4, scoped, tag = 'scoped memory for mesh_cls_forward.9']
    %14 = vsyncpa [#allocation3], 0
    %15 = vsyncpa [#allocation5], 0
    // Predicated region
    $region2: #{mesh_cls_forward.9} parent=1 // pred_check
      _
    $region3: #{mesh_cls_forward.9} parent=1 // pred_check_branch
      %17 = sbr.rel (0) target = $region5
    $region4: #{mesh_cls_forward.9} parent=1 // pred_region
      _
    $region5: #{mesh_cls_forward.9} parent=1 // pred_fallthru
      _
    // Predicated region
    $region6: #{mesh_cls_forward.9} parent=1 // pred_check
      _
    $region7: #{mesh_cls_forward.9} parent=1 // pred_check_branch
      %19 = sbr.rel (0) target = $region9
    $region8: #{mesh_cls_forward.9} parent=1 // pred_region
      _
    $region9: #{mesh_cls_forward.9} parent=1 // pred_fallthru
      _
    // Predicated region
    $region10: #{mesh_cls_forward.9} parent=1 // pred_check
      _
    $region11: #{mesh_cls_forward.9} parent=1 // pred_check_branch
      %21 = sbr.rel (0) target = $region13
    $region12: #{mesh_cls_forward.9} parent=1 // pred_region
      _
    $region13: #{mesh_cls_forward.9} parent=1 // pred_fallthru
      _
    // Predicated region
    $region14: #{mesh_cls_forward.9} parent=1 // pred_check
      _
    $region15: #{mesh_cls_forward.9} parent=1 // pred_check_branch
      %23 = sbr.rel (0) target = $region17
    $region16: #{mesh_cls_forward.9} parent=1 // pred_region
      _
    $region17: #{mesh_cls_forward.9} parent=1 // pred_fallthru
      _
    // Predicated region
    $region18: #{mesh_cls_forward.9} parent=1 // pred_check
      _
    $region19: #{mesh_cls_forward.9} parent=1 // pred_check_branch
      %25 = sbr.rel (0) target = $region21
    $region20: #{mesh_cls_forward.9} parent=1 // pred_region
      _
    $region21: #{mesh_cls_forward.9} parent=1 // pred_fallthru
      _
    // Predicated region
    $region22: #{mesh_cls_forward.9} parent=1 // pred_check
      _
    $region23: #{mesh_cls_forward.9} parent=1 // pred_check_branch
      %27 = sbr.rel (0) target = $region25
    $region24: #{mesh_cls_forward.9} parent=1 // pred_region
      _
    $region25: #{mesh_cls_forward.9} parent=1 // pred_fallthru
      _
    %v28 = vld [vmem:[%s0] sm:$0x3]
    %v29 = vld [vmem:[%s1] sm:$0xff]
    %v30 = vld [vmem:[%s1 + $0x8] sm:$0xff]
    %v31 = vld [vmem:[%s1 + $0x10] sm:$0xff]
    %v32 = vld [vmem:[%s1 + $0x18] sm:$0xff]
    %v33 = vld [vmem:[%s1 + $0x20] sm:$0xff]
    %v34 = vld [vmem:[%s1 + $0x28] sm:$0xff]
    %v35 = vld [vmem:[%s1 + $0x30] sm:$0xff]
    %v36 = vld [vmem:[%s1 + $0x38] sm:$0xff]
    %v37 = vld [vmem:[%s1 + $0x40] sm:$0xff]
    %v38 = vld [vmem:[%s1 + $0x48] sm:$0xff]
    %v39 = vld [vmem:[%s1 + $0x50] sm:$0xff]
    %v40 = vld [vmem:[%s1 + $0x58] sm:$0xff]
    %v41 = vld [vmem:[%s1 + $0x60] sm:$0xff]
    %v42 = vld [vmem:[%s1 + $0x68] sm:$0xff]
    %v43 = vld [vmem:[%s1 + $0x70] sm:$0xff]
    %v44 = vld [vmem:[%s1 + $0x78] sm:$0xff]
    %45 = vmatprep.subr.mxu0 0.0
    %46 = vmatpush1.msra.mxu0 %v29
    %47 = vmatprep.subr.mxu0 0.0
    %48 = vmatpush1.msra.mxu0 %v30
    %49 = vmatprep.subr.mxu0 0.0
    %50 = vmatpush1.msra.mxu0 %v31
    %51 = vmatprep.subr.mxu0 0.0
    %52 = vmatpush1.msra.mxu0 %v32
    %53 = vmatprep.subr.mxu0 0.0
    %54 = vmatpush1.msra.mxu0 %v33
    %55 = vmatprep.subr.mxu0 0.0
    %56 = vmatpush1.msra.mxu0 %v34
    %57 = vmatprep.subr.mxu0 0.0
    %58 = vmatpush1.msra.mxu0 %v35
    %59 = vmatprep.subr.mxu0 0.0
    %60 = vmatpush1.msra.mxu0 %v36
    %61 = vmatprep.subr.mxu0 0.0
    %62 = vmatpush1.msra.mxu0 %v37
    %63 = vmatprep.subr.mxu0 0.0
    %64 = vmatpush1.msra.mxu0 %v38
    %65 = vmatprep.subr.mxu0 0.0
    %66 = vmatpush1.msra.mxu0 %v39
    %67 = vmatprep.subr.mxu0 0.0
    %68 = vmatpush1.msra.mxu0 %v40
    %69 = vmatprep.subr.mxu0 0.0
    %70 = vmatpush1.msra.mxu0 %v41
    %71 = vmatprep.subr.mxu0 0.0
    %72 = vmatpush1.msra.mxu0 %v42
    %73 = vmatprep.subr.mxu0 0.0
    %74 = vmatpush1.msra.mxu0 %v43
    %75 = vmatprep.subr.mxu0 0.0
    %76 = vmatpush1.msra.mxu0 %v44
    %77 = vmatprep.subr.mxu0 0.0
    %78 = vmatpush1.msra.mxu0 0.0
    %79 = vmatprep.subr.mxu0 0.0
    %80 = vmatpush1.msra.mxu0 0.0
    %81 = vmatprep.subr.mxu0 0.0
    %82 = vmatpush1.msra.mxu0 0.0
    %83 = vmatprep.subr.mxu0 0.0
    %84 = vmatpush1.msra.mxu0 0.0
    %85 = vmatprep.subr.mxu0 0.0
    %86 = vmatpush1.msra.mxu0 0.0
    %87 = vmatprep.subr.mxu0 0.0
    %88 = vmatpush1.msra.mxu0 0.0
    %89 = vmatprep.subr.mxu0 0.0
    %90 = vmatpush1.msra.mxu0 0.0
    %91 = vmatprep.subr.mxu0 0.0
    %92 = vmatpush1.msra.mxu0 0.0
    %93 = vmatprep.subr.mxu0 0.0
    %94 = vmatpush1.msra.mxu0 0.0
    %95 = vmatprep.subr.mxu0 0.0
    %96 = vmatpush1.msra.mxu0 0.0
    %97 = vmatprep.subr.mxu0 0.0
    %98 = vmatpush1.msra.mxu0 0.0
    %99 = vmatprep.subr.mxu0 0.0
    %100 = vmatpush1.msra.mxu0 0.0
    %101 = vmatprep.subr.mxu0 0.0
    %102 = vmatpush1.msra.mxu0 0.0
    %103 = vmatprep.subr.mxu0 0.0
    %104 = vmatpush1.msra.mxu0 0.0
    %105 = vmatprep.subr.mxu0 0.0
    %106 = vmatpush1.msra.mxu0 0.0
    %107 = vmatprep.subr.mxu0 0.0
    %108 = vmatpush1.msra.mxu0 0.0
    %109 = vmatprep.mubr.f32.mxu0 0.0
    %110 = vmatmul.mubr.f32.gmra.mrb[0].mxu0 %v28
    %v111 = vpop.f32.mrb[0].mxu0
    %v112 = vadd.f32 0.0, %v111
    %v113 = vpop.f32.mrb[0].mxu0
    %114 = vdwg.mxu0
    %115 = vst [vmem:[#allocation2] sm:$0x3] %v112
    %v116 = vld [vmem:[%s2] sm:$0xff]
    %v117 = vld [vmem:[%s2 + $0x8] sm:$0xff]
    %v118 = vld [vmem:[%s2 + $0x10] sm:$0xff]
    %v119 = vld [vmem:[%s2 + $0x18] sm:$0xff]
    %v120 = vld [vmem:[%s2 + $0x20] sm:$0xff]
    %v121 = vld [vmem:[%s2 + $0x28] sm:$0xff]
    %v122 = vld [vmem:[%s2 + $0x30] sm:$0xff]
    %v123 = vld [vmem:[%s2 + $0x38] sm:$0xff]
    %v124 = vld [vmem:[%s2 + $0x40] sm:$0xff]
    %v125 = vld [vmem:[%s2 + $0x48] sm:$0xff]
    %v126 = vld [vmem:[%s2 + $0x50] sm:$0xff]
    %v127 = vld [vmem:[%s2 + $0x58] sm:$0xff]
    %v128 = vld [vmem:[%s2 + $0x60] sm:$0xff]
    %v129 = vld [vmem:[%s2 + $0x68] sm:$0xff]
    %v130 = vld [vmem:[%s2 + $0x70] sm:$0xff]
    %v131 = vld [vmem:[%s2 + $0x78] sm:$0xff]
    %v132 = vld [vmem:[%s3] sm:$0x1]
    %v134 = vlaneseq
    %v135 = vshrl.u32 %v134, 7
    %v136 = vsub.s32 0, %v135
    %v137 = vrot.slane %v132, %v136
    %139 = vmatprep.subr.mxu0 0.0
    %140 = vmatpush1.msra.mxu0 %v116
    %141 = vmatprep.subr.mxu0 0.0
    %142 = vmatpush1.msra.mxu0 %v117
    %143 = vmatprep.subr.mxu0 0.0
    %144 = vmatpush1.msra.mxu0 %v118
    %145 = vmatprep.subr.mxu0 0.0
    %146 = vmatpush1.msra.mxu0 %v119
    %147 = vmatprep.subr.mxu0 0.0
    %148 = vmatpush1.msra.mxu0 %v120
    %149 = vmatprep.subr.mxu0 0.0
    %150 = vmatpush1.msra.mxu0 %v121
    %151 = vmatprep.subr.mxu0 0.0
    %152 = vmatpush1.msra.mxu0 %v122
    %153 = vmatprep.subr.mxu0 0.0
    %154 = vmatpush1.msra.mxu0 %v123
    %155 = vmatprep.subr.mxu0 0.0
    %156 = vmatpush1.msra.mxu0 %v124
    %157 = vmatprep.subr.mxu0 0.0
    %158 = vmatpush1.msra.mxu0 %v125
    %159 = vmatprep.subr.mxu0 0.0
    %160 = vmatpush1.msra.mxu0 %v126
    %161 = vmatprep.subr.mxu0 0.0
    %162 = vmatpush1.msra.mxu0 %v127
    %163 = vmatprep.subr.mxu0 0.0
    %164 = vmatpush1.msra.mxu0 %v128
    %165 = vmatprep.subr.mxu0 0.0
    %166 = vmatpush1.msra.mxu0 %v129
    %167 = vmatprep.subr.mxu0 0.0
    %168 = vmatpush1.msra.mxu0 %v130
    %169 = vmatprep.subr.mxu0 0.0
    %170 = vmatpush1.msra.mxu0 %v131
    %171 = vmatprep.subr.mxu0 0.0
    %172 = vmatpush1.msra.mxu0 0.0
    %173 = vmatprep.subr.mxu0 0.0
    %174 = vmatpush1.msra.mxu0 0.0
    %175 = vmatprep.subr.mxu0 0.0
    %176 = vmatpush1.msra.mxu0 0.0
    %177 = vmatprep.subr.mxu0 0.0
    %178 = vmatpush1.msra.mxu0 0.0
    %179 = vmatprep.subr.mxu0 0.0
    %180 = vmatpush1.msra.mxu0 0.0
    %181 = vmatprep.subr.mxu0 0.0
    %182 = vmatpush1.msra.mxu0 0.0
    %183 = vmatprep.subr.mxu0 0.0
    %184 = vmatpush1.msra.mxu0 0.0
    %185 = vmatprep.subr.mxu0 0.0
    %186 = vmatpush1.msra.mxu0 0.0
    %187 = vmatprep.subr.mxu0 0.0
    %188 = vmatpush1.msra.mxu0 0.0
    %189 = vmatprep.subr.mxu0 0.0
    %190 = vmatpush1.msra.mxu0 0.0
    %191 = vmatprep.subr.mxu0 0.0
    %192 = vmatpush1.msra.mxu0 0.0
    %193 = vmatprep.subr.mxu0 0.0
    %194 = vmatpush1.msra.mxu0 0.0
    %195 = vmatprep.subr.mxu0 0.0
    %196 = vmatpush1.msra.mxu0 0.0
    %197 = vmatprep.subr.mxu0 0.0
    %198 = vmatpush1.msra.mxu0 0.0
    %199 = vmatprep.subr.mxu0 0.0
    %200 = vmatpush1.msra.mxu0 0.0
    %201 = vmatprep.subr.mxu0 0.0
    %202 = vmatpush1.msra.mxu0 0.0
    %203 = vmatprep.mubr.f32.mxu0 0.0
    %204 = vmatmul.mubr.f32.gmra.mrb[0].mxu0 %v112
    %v205 = vpop.f32.mrb[0].mxu0
    %v206 = vadd.f32 %v137, %v205
    %v207 = vpop.f32.mrb[0].mxu0
    %208 = vdwg.mxu0
    %vm209 = vcmask 254976
    %210 = vst.msk [vmem:[#allocation4] sm:$0x3] %vm209, %v206
    %v211 = vmax.f32 %v206, 0.0
    %v212 = vld [vmem:[%s4] sm:$0xff]
    %v213 = vld [vmem:[%s4 + $0x8] sm:$0xff]
    %v214 = vld [vmem:[%s4 + $0x10] sm:$0xff]
    %v215 = vld [vmem:[%s4 + $0x18] sm:$0xff]
    %v216 = vld [vmem:[%s5] sm:$0x1]
    %v218 = vlaneseq
    %v219 = vshrl.u32 %v218, 7
    %v220 = vsub.s32 0, %v219
    %v221 = vrot.slane %v216, %v220
    %vm223 = vcmask 261120
    %v225 = vsel %vm223, %v211, 0
    %227 = vmatprep.subr.mxu0 0.0
    %228 = vmatpush1.msra.mxu0 %v212
    %229 = vmatprep.subr.mxu0 0.0
    %230 = vmatpush1.msra.mxu0 %v213
    %231 = vmatprep.subr.mxu0 0.0
    %232 = vmatpush1.msra.mxu0 %v214
    %233 = vmatprep.subr.mxu0 0.0
    %234 = vmatpush1.msra.mxu0 %v215
    %235 = vmatprep.subr.mxu0 0.0
    %236 = vmatpush1.msra.mxu0 0.0
    %237 = vmatprep.subr.mxu0 0.0
    %238 = vmatpush1.msra.mxu0 0.0
    %239 = vmatprep.subr.mxu0 0.0
    %240 = vmatpush1.msra.mxu0 0.0
    %241 = vmatprep.subr.mxu0 0.0
    %242 = vmatpush1.msra.mxu0 0.0
    %243 = vmatprep.subr.mxu0 0.0
    %244 = vmatpush1.msra.mxu0 0.0
    %245 = vmatprep.subr.mxu0 0.0
    %246 = vmatpush1.msra.mxu0 0.0
    %247 = vmatprep.subr.mxu0 0.0
    %248 = vmatpush1.msra.mxu0 0.0
    %249 = vmatprep.subr.mxu0 0.0
    %250 = vmatpush1.msra.mxu0 0.0
    %251 = vmatprep.subr.mxu0 0.0
    %252 = vmatpush1.msra.mxu0 0.0
    %253 = vmatprep.subr.mxu0 0.0
    %254 = vmatpush1.msra.mxu0 0.0
    %255 = vmatprep.subr.mxu0 0.0
    %256 = vmatpush1.msra.mxu0 0.0
    %257 = vmatprep.subr.mxu0 0.0
    %258 = vmatpush1.msra.mxu0 0.0
    %259 = vmatprep.subr.mxu0 0.0
    %260 = vmatpush1.msra.mxu0 0.0
    %261 = vmatprep.subr.mxu0 0.0
    %262 = vmatpush1.msra.mxu0 0.0
    %263 = vmatprep.subr.mxu0 0.0
    %264 = vmatpush1.msra.mxu0 0.0
    %265 = vmatprep.subr.mxu0 0.0
    %266 = vmatpush1.msra.mxu0 0.0
    %267 = vmatprep.subr.mxu0 0.0
    %268 = vmatpush1.msra.mxu0 0.0
    %269 = vmatprep.subr.mxu0 0.0
    %270 = vmatpush1.msra.mxu0 0.0
    %271 = vmatprep.subr.mxu0 0.0
    %272 = vmatpush1.msra.mxu0 0.0
    %273 = vmatprep.subr.mxu0 0.0
    %274 = vmatpush1.msra.mxu0 0.0
    %275 = vmatprep.subr.mxu0 0.0
    %276 = vmatpush1.msra.mxu0 0.0
    %277 = vmatprep.subr.mxu0 0.0
    %278 = vmatpush1.msra.mxu0 0.0
    %279 = vmatprep.subr.mxu0 0.0
    %280 = vmatpush1.msra.mxu0 0.0
    %281 = vmatprep.subr.mxu0 0.0
    %282 = vmatpush1.msra.mxu0 0.0
    %283 = vmatprep.subr.mxu0 0.0
    %284 = vmatpush1.msra.mxu0 0.0
    %285 = vmatprep.subr.mxu0 0.0
    %286 = vmatpush1.msra.mxu0 0.0
    %287 = vmatprep.subr.mxu0 0.0
    %288 = vmatpush1.msra.mxu0 0.0
    %289 = vmatprep.subr.mxu0 0.0
    %290 = vmatpush1.msra.mxu0 0.0
    %291 = vmatprep.mubr.f32.mxu0 0.0
    %292 = vmatmul.mubr.f32.gmra.mrb[0].mxu0 %v225
    %v293 = vpop.f32.mrb[0].mxu0
    %v294 = vadd.f32 %v221, %v293
    %v295 = vpop.f32.mrb[0].mxu0
    %296 = vdwg.mxu0
    %vm297 = vcmask 74752
    %298 = vst.msk [vmem:[%s8] sm:$0x3] %vm297, %v294
    // Predicated region
    $region26: #{mesh_cls_forward.9} parent=1 // pred_check
      _
    $region27: #{mesh_cls_forward.9} parent=1 // pred_check_branch
      %300 = sbr.rel (0) target = $region29
    $region28: #{mesh_cls_forward.9} parent=1 // pred_region
      %s302 = ssub.s32 32, 32
      %303 = vsyncadd [#allocation3], %s302
      %s305 = sshll.u32 [#allocation2], 4
      %s306 = int_to_ptr.vmem [resolvable:$true] %s305
      %308 = dma.vmem_to_hbm [thread:$0]  %s306, 32, %s6, [#allocation3]
    $region29: #{mesh_cls_forward.9} parent=1 // pred_fallthru
      _
    // Predicated region
    $region30: #{mesh_cls_forward.9} parent=1 // pred_check
      _
    $region31: #{mesh_cls_forward.9} parent=1 // pred_check_branch
      %310 = sbr.rel (0) target = $region33
    $region32: #{mesh_cls_forward.9} parent=1 // pred_region
      %s312 = ssub.s32 32, 32
      %313 = vsyncadd [#allocation5], %s312
      %s315 = sshll.u32 [#allocation4], 4
      %s316 = int_to_ptr.vmem [resolvable:$true] %s315
      %318 = dma.vmem_to_hbm [thread:$0]  %s316, 32, %s7, [#allocation5]
    $region33: #{mesh_cls_forward.9} parent=1 // pred_fallthru
      _
    // Predicated region
    $region34: #{mesh_cls_forward.9} parent=1 // pred_check
      _
    $region35: #{mesh_cls_forward.9} parent=1 // pred_check_branch
      %320 = sbr.rel (0) target = $region37
    $region36: #{mesh_cls_forward.9} parent=1 // pred_region
      _
    $region37: #{mesh_cls_forward.9} parent=1 // pred_fallthru
      _
    // Predicated region
    $region38: #{mesh_cls_forward.9} parent=1 // pred_check
      _
    $region39: #{mesh_cls_forward.9} parent=1 // pred_check_branch
      %322 = sbr.rel (0) target = $region41
    $region40: #{mesh_cls_forward.9} parent=1 // pred_region
      %323 = dma.done [#allocation3], 32
    $region41: #{mesh_cls_forward.9} parent=1 // pred_fallthru
      _
    // Predicated region
    $region42: #{mesh_cls_forward.9} parent=1 // pred_check
      _
    $region43: #{mesh_cls_forward.9} parent=1 // pred_check_branch
      %325 = sbr.rel (0) target = $region45
    $region44: #{mesh_cls_forward.9} parent=1 // pred_region
      %326 = dma.done [#allocation5], 32
    $region45: #{mesh_cls_forward.9} parent=1 // pred_fallthru
      _
    // Predicated region
    $region46: #{mesh_cls_forward.9} parent=1 // pred_check
      _
    $region47: #{mesh_cls_forward.9} parent=1 // pred_check_branch
      %328 = sbr.rel (0) target = $region49
    $region48: #{mesh_cls_forward.9} parent=1 // pred_region
      _
    $region49: #{mesh_cls_forward.9} parent=1 // pred_fallthru
      _
    %329 = vsyncpa [#allocation3], 1
    %330 = vsyncpa [#allocation5], 1

</llo_original>
